<compile_context>
chip_gen: v7x
topology: tpu7x:2x2x1
jax: 0.10.0
libtpu: 0.0.40
codegen_flags: <defaults>
</compile_context>

<pallas_src>
import jax
import jax.numpy as jnp
from jax.experimental import pallas as pl
from jax.experimental.pallas import tpu as pltpu


def _decoder_kernel(z_ref, w1_ref, b1_ref, w2_ref, b2_ref, o_ref):
    # z: (TILE_B, L) f32; w1: (L, 512) bf16; w2: (512, OUT_PAD) bf16; biases f32.
    z = z_ref[...]

    # Layer 1: bf16 operands, f32 accumulation. (K=32 underfills the MXU but is
    # <2% of FLOPs/bytes -- intentionally left simple.)
    h = jnp.dot(z.astype(jnp.bfloat16), w1_ref[...],
                preferred_element_type=jnp.float32)
    h = h + b1_ref[...]                      # broadcast (1, 512)
    h = jnp.maximum(h, 0.0)                  # ReLU in f32

    # Layer 2: the dominant matmul -- bf16 MXU, 896-lane (padded) output.
    logits = jnp.dot(h.astype(jnp.bfloat16), w2_ref[...],
                     preferred_element_type=jnp.float32)
    logits = logits + b2_ref[...]            # broadcast (1, OUT_PAD)

    # sigmoid = 1 / (1 + exp(-x)); exp -> EUP, reciprocal (approx) -> EUP.
    denom = 1.0 + jnp.exp(-logits)
    o_ref[...] = pl.reciprocal(denom, approx=True).astype(o_ref.dtype)


def _round_up(x, m):
    return ((x + m - 1) // m) * m


def decoder_forward(z, w1, b1, w2, b2):
    """Fused decoder MLP.

    z:  (B, L) float32
    w1: (L, 512), b1: (512,)
    w2: (512, 784), b2: (784,)
    returns: ((B, 1, 28, 28) float32, (w1, b1))
    """
    B, L = z.shape
    H = w1.shape[1]                 # 512
    OUT = w2.shape[1]               # 784
    OUT_PAD = _round_up(OUT, 128)   # 896 = 7 * 128 (lane-dense output)

    # Weight prep: bf16 weights (halves the dominant DMA), zero-padded last layer.
    w1_bf = w1.astype(jnp.bfloat16)                                   # (L, 512)
    w2_pad = jnp.zeros((H, OUT_PAD), jnp.bfloat16)
    w2_pad = w2_pad.at[:, :OUT].set(w2.astype(jnp.bfloat16))          # (512, 896)
    b1_2d = b1.reshape(1, H).astype(jnp.float32)                      # (1, 512)
    b2_pad = jnp.zeros((1, OUT_PAD), jnp.float32)
    b2_pad = b2_pad.at[:, :OUT].set(b2.reshape(1, OUT))               # (1, 896)

    # Batch tiling: weights stay VMEM-resident across grid steps; batch axis is
    # parallel (v7x: 2 TCs split it). TILE_B = 256 matches the 256-wide MXU M
    # dim on v6e/v7x; small batches use a single padded-to-8 tile.
    MAX_TILE_B = 256
    if B <= MAX_TILE_B:
        tile_b = _round_up(max(B, 1), 8)
        B_pad = tile_b
    else:
        tile_b = MAX_TILE_B
        B_pad = _round_up(B, tile_b)
    z_pad = z if B_pad == B else jnp.pad(z, ((0, B_pad - B), (0, 0)))

    grid = (B_pad // tile_b,)

    out = pl.pallas_call(
        _decoder_kernel,
        out_shape=jax.ShapeDtypeStruct((B_pad, OUT_PAD), jnp.float32),
        grid=grid,
        in_specs=[
            pl.BlockSpec((tile_b, L), lambda i: (i, 0)),        # z: tiled over B
            pl.BlockSpec((L, H), lambda i: (0, 0)),             # w1: resident
            pl.BlockSpec((1, H), lambda i: (0, 0)),             # b1: resident
            pl.BlockSpec((H, OUT_PAD), lambda i: (0, 0)),       # w2: resident
            pl.BlockSpec((1, OUT_PAD), lambda i: (0, 0)),       # b2: resident
        ],
        out_specs=pl.BlockSpec((tile_b, OUT_PAD), lambda i: (i, 0)),
        compiler_params=pltpu.CompilerParams(
            dimension_semantics=("parallel",),
        ),
    )(z_pad, w1_bf, b1_2d, w2_pad, b2_pad)

    # Drop batch padding and the zero-padded lanes, then view as NCHW to match
    # the PyTorch module. (If the consumer can take (B, 784) directly, skip the
    # reshape to avoid the extra relayout copy.)
    out = out[:B, :OUT]
    images = out.reshape(-1, 1, 28, 28)
    self_modelling_layer = (w1, b1)   # analogue of returning the nn.Linear module
    return images, self_modelling_layer


def init_decoder_params(key, latent_dimensions):
    """Deterministic init mimicking torch.nn.Linear default (uniform +/- 1/sqrt(fan_in))."""
    assert latent_dimensions > 1
    k1, k2, k3, k4 = jax.random.split(key, 4)
    bound1 = 1.0 / jnp.sqrt(latent_dimensions)
    w1 = jax.random.uniform(k1, (latent_dimensions, 512), jnp.float32, -bound1, bound1)
    b1 = jax.random.uniform(k2, (512,), jnp.float32, -bound1, bound1)
    bound2 = 1.0 / jnp.sqrt(512.0)
    w2 = jax.random.uniform(k3, (512, 784), jnp.float32, -bound2, bound2)
    b2 = jax.random.uniform(k4, (784,), jnp.float32, -bound2, bound2)
    return w1, b1, w2, b2


if __name__ == "__main__":
    key = jax.random.PRNGKey(0)
    latent_dimensions = 32
    batch = 8

    kz, kp = jax.random.split(key)
    z = jax.random.normal(kz, (batch, latent_dimensions), jnp.float32)
    w1, b1, w2, b2 = init_decoder_params(kp, latent_dimensions)

    images, self_modelling_layer = decoder_forward(z, w1, b1, w2, b2)
    images = jax.block_until_ready(images)
    assert images.shape == (batch, 1, 28, 28), images.shape

    # Reference 1: same bf16 matmul recipe in plain JAX (isolates approx-recip error).
    h_bf = jnp.maximum(
        jnp.dot(z.astype(jnp.bfloat16), w1.astype(jnp.bfloat16),
                preferred_element_type=jnp.float32) + b1, 0.0)
    logits_bf = jnp.dot(h_bf.astype(jnp.bfloat16), w2.astype(jnp.bfloat16),
                        preferred_element_type=jnp.float32) + b2
    ref_bf = jax.nn.sigmoid(logits_bf).reshape(-1, 1, 28, 28)
    assert jnp.allclose(images, ref_bf, atol=1e-2, rtol=1e-2), "mismatch vs bf16 reference"

    # Reference 2: full f32 reference (loose tolerance covers bf16 rounding).
    h_ref = jnp.maximum(z @ w1 + b1, 0.0)
    ref_f32 = jax.nn.sigmoid(h_ref @ w2 + b2).reshape(-1, 1, 28, 28)
    assert jnp.allclose(images, ref_f32, atol=5e-2, rtol=5e-2), "mismatch vs f32 reference"

    print("KERNEL_OK")
</pallas_src>

<mosaic_0001>
module attributes {stable_mosaic.version = 11 : i64} {
  func.func @_decoder_kernel(%arg0: i32, %arg1: memref<8x32xf32, #tpu.memory_space<vmem>>, %arg2: memref<32x512xbf16, #tpu.memory_space<vmem>>, %arg3: memref<1x512xf32, #tpu.memory_space<vmem>>, %arg4: memref<512x896xbf16, #tpu.memory_space<vmem>>, %arg5: memref<1x896xf32, #tpu.memory_space<vmem>>, %arg6: memref<8x896xf32, #tpu.memory_space<vmem>>) attributes {dimension_semantics = [#tpu.dimension_semantics<parallel>], iteration_bounds = array<i64: 1>, scalar_prefetch = 0 : i64, scratch_operands = 0 : i64, tpu.core_type = #tpu.core_type<tc>, window_params = [{transform_indices = @transform_0, window_bounds = array<i64: 8, 32>}, {pipeline_mode = #tpu.pipeline_mode<synchronous>, transform_indices = @transform_1, window_bounds = array<i64: 32, 512>}, {pipeline_mode = #tpu.pipeline_mode<synchronous>, transform_indices = @transform_2, window_bounds = array<i64: 1, 512>}, {pipeline_mode = #tpu.pipeline_mode<synchronous>, transform_indices = @transform_3, window_bounds = array<i64: 512, 896>}, {pipeline_mode = #tpu.pipeline_mode<synchronous>, transform_indices = @transform_4, window_bounds = array<i64: 1, 896>}, {transform_indices = @transform_5, window_bounds = array<i64: 8, 896>}]} {
    %c0 = arith.constant 0 : index
    %c0_0 = arith.constant 0 : index
    %0 = vector.load %arg1[%c0, %c0_0] : memref<8x32xf32, #tpu.memory_space<vmem>>, vector<8x32xf32>
    %1 = arith.truncf %0 : vector<8x32xf32> to vector<8x32xbf16>
    %c0_1 = arith.constant 0 : index
    %c0_2 = arith.constant 0 : index
    %2 = vector.load %arg2[%c0_1, %c0_2] : memref<32x512xbf16, #tpu.memory_space<vmem>>, vector<32x512xbf16>
    %cst = arith.constant dense<0.000000e+00> : vector<8x512xf32>
    %3 = tpu.matmul %1, %2, %cst {dimension_numbers = #tpu.dot_dimension_numbers<[1], [0], [0], [1], [0, 0, 1, 1], [], []>} : vector<8x32xbf16>, vector<32x512xbf16>, vector<8x512xf32> -> vector<8x512xf32>
    %c0_3 = arith.constant 0 : index
    %c0_4 = arith.constant 0 : index
    %4 = vector.load %arg3[%c0_3, %c0_4] : memref<1x512xf32, #tpu.memory_space<vmem>>, vector<1x512xf32>
    %5 = vector.broadcast %4 : vector<1x512xf32> to vector<8x512xf32>
    %6 = arith.addf %3, %5 : vector<8x512xf32>
    %cst_5 = arith.constant 0.000000e+00 : f32
    %7 = vector.broadcast %cst_5 : f32 to vector<8x512xf32>
    %8 = arith.maximumf %6, %7 : vector<8x512xf32>
    %9 = arith.truncf %8 : vector<8x512xf32> to vector<8x512xbf16>
    %c0_6 = arith.constant 0 : index
    %c0_7 = arith.constant 0 : index
    %10 = vector.load %arg4[%c0_6, %c0_7] : memref<512x896xbf16, #tpu.memory_space<vmem>>, vector<512x896xbf16>
    %cst_8 = arith.constant dense<0.000000e+00> : vector<8x896xf32>
    %11 = tpu.matmul %9, %10, %cst_8 {dimension_numbers = #tpu.dot_dimension_numbers<[1], [0], [0], [1], [0, 0, 1, 1], [], []>} : vector<8x512xbf16>, vector<512x896xbf16>, vector<8x896xf32> -> vector<8x896xf32>
    %c0_9 = arith.constant 0 : index
    %c0_10 = arith.constant 0 : index
    %12 = vector.load %arg5[%c0_9, %c0_10] : memref<1x896xf32, #tpu.memory_space<vmem>>, vector<1x896xf32>
    %13 = vector.broadcast %12 : vector<1x896xf32> to vector<8x896xf32>
    %14 = arith.addf %11, %13 : vector<8x896xf32>
    %cst_11 = arith.constant 0.000000e+00 : f32
    %15 = vector.broadcast %cst_11 : f32 to vector<8x896xf32>
    %16 = arith.subf %15, %14 : vector<8x896xf32>
    %17 = math.exp %16 : vector<8x896xf32>
    %cst_12 = arith.constant 1.000000e+00 : f32
    %18 = vector.broadcast %cst_12 : f32 to vector<8x896xf32>
    %19 = arith.addf %18, %17 : vector<8x896xf32>
    %20 = tpu.reciprocal %19 {approx = true} : vector<8x896xf32> -> vector<8x896xf32>
    %c0_13 = arith.constant 0 : index
    %c0_14 = arith.constant 0 : index
    %21 = vector.load %arg6[%c0_13, %c0_14] : memref<8x896xf32, #tpu.memory_space<vmem>>, vector<8x896xf32>
    tpu.vector_store %arg6[%c0_13, %c0_14], %20 {strides = array<i32>} : memref<8x896xf32, #tpu.memory_space<vmem>>, vector<8x896xf32>,
    return
  }
  func.func @transform_0(%arg0: i32) -> (i32, i32) {
    %c0_i32 = arith.constant 0 : i32
    %c0_i32_0 = arith.constant 0 : i32
    return %arg0, %c0_i32 : i32, i32
  }
  func.func @transform_1(%arg0: i32) -> (i32, i32) {
    %c0_i32 = arith.constant 0 : i32
    %c0_i32_0 = arith.constant 0 : i32
    %c0_i32_1 = arith.constant 0 : i32
    return %c0_i32, %c0_i32_0 : i32, i32
  }
  func.func @transform_2(%arg0: i32) -> (i32, i32) {
    %c0_i32 = arith.constant 0 : i32
    %c0_i32_0 = arith.constant 0 : i32
    %c0_i32_1 = arith.constant 0 : i32
    return %c0_i32, %c0_i32_0 : i32, i32
  }
  func.func @transform_3(%arg0: i32) -> (i32, i32) {
    %c0_i32 = arith.constant 0 : i32
    %c0_i32_0 = arith.constant 0 : i32
    %c0_i32_1 = arith.constant 0 : i32
    return %c0_i32, %c0_i32_0 : i32, i32
  }
  func.func @transform_4(%arg0: i32) -> (i32, i32) {
    %c0_i32 = arith.constant 0 : i32
    %c0_i32_0 = arith.constant 0 : i32
    %c0_i32_1 = arith.constant 0 : i32
    return %c0_i32, %c0_i32_0 : i32, i32
  }
  func.func @transform_5(%arg0: i32) -> (i32, i32) {
    %c0_i32 = arith.constant 0 : i32
    %c0_i32_0 = arith.constant 0 : i32
    return %arg0, %c0_i32 : i32, i32
  }
}

</mosaic_0001>

<llo_original>
// kernel: tpu_custom_call.1
$region0: #{tpu_custom_call.1}
  #allocation0 [shape = 'u32[]', space=smem, size = 0x4, offset = 0x4, fixed_abs, tag = 'smem constant byte address 0x4 - core index']
  #allocation1 [shape = 'u32[144,128]{1,0:T(1,128)}', space=vmem, size = 0x12000, scoped, tag = 'internal scratch']
  %s0 = inlined_call_operand.hbm [shape: f32[8,32], index: 0, kind: input, shape index: {}]
  %s1 = inlined_call_operand.hbm [shape: bf16[32,512], index: 1, kind: input, shape index: {}]
  %s2 = inlined_call_operand.vmem [shape: f32[1,512], index: 2, kind: input, shape index: {}]
  %s3 = inlined_call_operand.hbm [shape: bf16[512,896], index: 3, kind: input, shape index: {}]
  %s4 = inlined_call_operand.vmem [shape: f32[1,896], index: 4, kind: input, shape index: {}]
  %s5 = inlined_call_operand.hbm [shape: f32[8,896], index: 5, kind: output, shape index: {}]
  %s6 = sld [smem:[#allocation0]]
  $region42: #{tpu_custom_call.1} parent=0
    _
  %s8 = ssub.s32 1, %s6
  %s9 = scalar_select 0, %s8, %s6
  $region1: #{tpu_custom_call.1} parent=0
    #allocation2 [shape = 'u8[4096]{0}', space=vmem, size = 0x1000, scoped, tag = 'input window, operand 0, single buffered']
    #allocation3 [shape = 's32[1]{0}', space=sflag, size = 0x4, scoped, tag = 'scoped memory for tpu_custom_call.1']
    #allocation4 [shape = 's32[1]{0}', space=sflag, size = 0x4, scoped, tag = 'scoped memory for tpu_custom_call.1']
    #allocation5 [shape = 'u8[32768]{0}', space=vmem, size = 0x8000, scoped, tag = 'input window, operand 1, single buffered']
    #allocation6 [shape = 's32[1]{0}', space=sflag, size = 0x4, scoped, tag = 'scoped memory for tpu_custom_call.1']
    #allocation7 [shape = 'u8[917504]{0}', space=vmem, size = 0xe0000, scoped, tag = 'input window, operand 3, single buffered']
    #allocation8 [shape = 'u8[28672]{0}', space=vmem, size = 0x7000, scoped, tag = 'output window, operand 0, single buffered']
    %10 = vsyncpa [#allocation3], 0
    %11 = vsyncpa [#allocation6], 0
    %12 = vsyncpa [#allocation4], 0
    // Predicated region
    $region2: #{tpu_custom_call.1} parent=1 // pred_check
      _
    $region3: #{tpu_custom_call.1} parent=1 // pred_check_branch
      %14 = sbr.rel (0) target = $region5
    $region4: #{tpu_custom_call.1} parent=1 // pred_region
      %s16 = ssub.s32 128, 128
      %17 = vsyncadd [#allocation3], %s16
      %s19 = sshll.u32 [#allocation2], 4
      %s20 = int_to_ptr.vmem [resolvable:$true] %s19
      %22 = dma.hbm_to_vmem [thread:$0]  %s0, 128, %s20, [#allocation3]
    $region5: #{tpu_custom_call.1} parent=1 // pred_fallthru
      _
    // Predicated region
    $region6: #{tpu_custom_call.1} parent=1 // pred_check
      _
    $region7: #{tpu_custom_call.1} parent=1 // pred_check_branch
      %24 = sbr.rel (0) target = $region9
    $region8: #{tpu_custom_call.1} parent=1 // pred_region
      %s26 = ssub.s32 1024, 1024
      %27 = vsyncadd [#allocation6], %s26
      %s28 = sshll.u32 [#allocation5], 4
      %s29 = int_to_ptr.vmem [resolvable:$true] %s28
      %34 = dma.hbm_to_vmem [thread:$0]  %s1, 1024, %s29, [#allocation6], 256, 256, 16
    $region9: #{tpu_custom_call.1} parent=1 // pred_fallthru
      _
    // Predicated region
    $region10: #{tpu_custom_call.1} parent=1 // pred_check
      _
    $region11: #{tpu_custom_call.1} parent=1 // pred_check_branch
      %36 = sbr.rel (0) target = $region13
    $region12: #{tpu_custom_call.1} parent=1 // pred_region
      _
    $region13: #{tpu_custom_call.1} parent=1 // pred_fallthru
      _
    // Predicated region
    $region14: #{tpu_custom_call.1} parent=1 // pred_check
      _
    $region15: #{tpu_custom_call.1} parent=1 // pred_check_branch
      %38 = sbr.rel (0) target = $region17
    $region16: #{tpu_custom_call.1} parent=1 // pred_region
      %s40 = ssub.s32 28672, 28672
      %41 = vsyncadd [#allocation6], %s40
      %s42 = sshll.u32 [#allocation7], 4
      %s43 = int_to_ptr.vmem [resolvable:$true] %s42
      %48 = dma.hbm_to_vmem [thread:$0]  %s3, 28672, %s43, [#allocation6], 448, 448, 28
    $region17: #{tpu_custom_call.1} parent=1 // pred_fallthru
      _
    // Predicated region
    $region18: #{tpu_custom_call.1} parent=1 // pred_check
      _
    $region19: #{tpu_custom_call.1} parent=1 // pred_check_branch
      %50 = sbr.rel (0) target = $region21
    $region20: #{tpu_custom_call.1} parent=1 // pred_region
      _
    $region21: #{tpu_custom_call.1} parent=1 // pred_fallthru
      _
    // Predicated region
    $region22: #{tpu_custom_call.1} parent=1 // pred_check
      _
    $region23: #{tpu_custom_call.1} parent=1 // pred_check_branch
      %52 = sbr.rel (0) target = $region25
    $region24: #{tpu_custom_call.1} parent=1 // pred_region
      %53 = dma.done [#allocation3], 128
    $region25: #{tpu_custom_call.1} parent=1 // pred_fallthru
      _
    // Predicated region
    $region26: #{tpu_custom_call.1} parent=1 // pred_check
      _
    $region27: #{tpu_custom_call.1} parent=1 // pred_check_branch
      %55 = sbr.rel (0) target = $region29
    $region28: #{tpu_custom_call.1} parent=1 // pred_region
      %56 = dma.done [#allocation6], 1024
    $region29: #{tpu_custom_call.1} parent=1 // pred_fallthru
      _
    // Predicated region
    $region30: #{tpu_custom_call.1} parent=1 // pred_check
      _
    $region31: #{tpu_custom_call.1} parent=1 // pred_check_branch
      %58 = sbr.rel (0) target = $region33
    $region32: #{tpu_custom_call.1} parent=1 // pred_region
      %59 = dma.done [#allocation6], 28672
    $region33: #{tpu_custom_call.1} parent=1 // pred_fallthru
      _
    %v61 = vld [vmem:[#allocation2] sm:$0xff]
    %v62 = vpack.c.bf16 %v61, %v61
    %v63 = vld [vmem:[#allocation5] sm:$0xff]
    %v64 = vld [vmem:[#allocation5 + $0x8] sm:$0xff]
    %v65 = vld [vmem:[#allocation5 + $0x10] sm:$0xff]
    %v66 = vld [vmem:[#allocation5 + $0x18] sm:$0xff]
    %v67 = vld [vmem:[#allocation5 + $0x20] sm:$0xff]
    %v68 = vld [vmem:[#allocation5 + $0x28] sm:$0xff]
    %v69 = vld [vmem:[#allocation5 + $0x30] sm:$0xff]
    %v70 = vld [vmem:[#allocation5 + $0x38] sm:$0xff]
    %v71 = vld [vmem:[%s2] sm:$0xf]
    %v73 = vlaneseq
    %v74 = vshrl.u32 %v73, 7
    %v75 = vsub.s32 0, %v74
    %v76 = vrot.slane %v71, %v75
    %v77 = vlaneseq
    %v78 = vshrl.u32 %v77, 7
    %v79 = vsub.s32 1, %v78
    %v80 = vrot.slane %v71, %v79
    %v81 = vlaneseq
    %v82 = vshrl.u32 %v81, 7
    %v83 = vsub.s32 2, %v82
    %v84 = vrot.slane %v71, %v83
    %v85 = vlaneseq
    %v86 = vshrl.u32 %v85, 7
    %v87 = vsub.s32 3, %v86
    %v88 = vrot.slane %v71, %v87
    %v101 = vunpack.c.l.b16 %v63
    %v102 = vunpack.c.h.b16 %v63
    %v103 = vunpack.c.l.b16 %v64
    %v104 = vunpack.c.h.b16 %v64
    %v105 = vunpack.c.l.b16 %v65
    %v106 = vunpack.c.h.b16 %v65
    %v107 = vunpack.c.l.b16 %v66
    %v108 = vunpack.c.h.b16 %v66
    %v109 = vunpack.c.l.b16 %v67
    %v110 = vunpack.c.h.b16 %v67
    %v111 = vunpack.c.l.b16 %v68
    %v112 = vunpack.c.h.b16 %v68
    %v113 = vunpack.c.l.b16 %v69
    %v114 = vunpack.c.h.b16 %v69
    %v115 = vunpack.c.l.b16 %v70
    %v116 = vunpack.c.h.b16 %v70
    %v117 = vpack.c.b16 %v105, %v101
    %v118 = vpack.c.b16 %v106, %v102
    %v119 = vpack.c.b16 %v107, %v103
    %v120 = vpack.c.b16 %v108, %v104
    %v121 = vpack.c.b16 %v113, %v109
    %v122 = vpack.c.b16 %v114, %v110
    %v123 = vpack.c.b16 %v115, %v111
    %v124 = vpack.c.b16 %v116, %v112
    %vm133 = vcmask 261120
    %v135 = vsel %vm133, %v62, 0
    %137 = vmatprep.subr.bf16.mxu0 %v118
    %138 = vmatpush1.bf16.msra.mxu0 %v117
    %139 = vmatprep.subr.bf16.mxu0 %v122
    %140 = vmatpush1.bf16.msra.mxu0 %v121
    %141 = vmatprep.subr.bf16.mxu0 0
    %142 = vmatpush1.bf16.msra.mxu0 0
    %143 = vmatprep.subr.bf16.mxu0 0
    %144 = vmatpush1.bf16.msra.mxu0 0
    %145 = vmatprep.subr.bf16.mxu0 0
    %146 = vmatpush1.bf16.msra.mxu0 0
    %147 = vmatprep.subr.bf16.mxu0 0
    %148 = vmatpush1.bf16.msra.mxu0 0
    %149 = vmatprep.subr.bf16.mxu0 0
    %150 = vmatpush1.bf16.msra.mxu0 0
    %151 = vmatprep.subr.bf16.mxu0 0
    %152 = vmatpush1.bf16.msra.mxu0 0
    %153 = vmatprep.subr.bf16.mxu0 0
    %154 = vmatpush1.bf16.msra.mxu0 0
    %155 = vmatprep.subr.bf16.mxu0 0
    %156 = vmatpush1.bf16.msra.mxu0 0
    %157 = vmatprep.subr.bf16.mxu0 0
    %158 = vmatpush1.bf16.msra.mxu0 0
    %159 = vmatprep.subr.bf16.mxu0 0
    %160 = vmatpush1.bf16.msra.mxu0 0
    %161 = vmatprep.subr.bf16.mxu0 0
    %162 = vmatpush1.bf16.msra.mxu0 0
    %163 = vmatprep.subr.bf16.mxu0 0
    %164 = vmatpush1.bf16.msra.mxu0 0
    %165 = vmatprep.subr.bf16.mxu0 0
    %166 = vmatpush1.bf16.msra.mxu0 0
    %167 = vmatprep.subr.bf16.mxu0 0
    %168 = vmatpush1.bf16.msra.mxu0 0
    %169 = vmatprep.mubr.bf16.mxu0 0
    %170 = vmatmul.mubr.bf16.gmra.mrb[0].mxu0 %v135
    %v171 = vpop.f32.mrb[0].mxu0
    %v172 = vadd.f32 %v76, %v171
    %v173 = vpop.f32.mrb[0].mxu0
    %v174 = vadd.f32 %v80, %v173
    %v175 = vpop.f32.mrb[0].mxu0
    %v176 = vpop.f32.mrb[0].mxu0
    %177 = vdwg.mxu0
    %178 = vmatprep.subr.bf16.mxu0 %v120
    %179 = vmatpush1.bf16.msra.mxu0 %v119
    %180 = vmatprep.subr.bf16.mxu0 %v124
    %181 = vmatpush1.bf16.msra.mxu0 %v123
    %182 = vmatprep.subr.bf16.mxu0 0
    %183 = vmatpush1.bf16.msra.mxu0 0
    %184 = vmatprep.subr.bf16.mxu0 0
    %185 = vmatpush1.bf16.msra.mxu0 0
    %186 = vmatprep.subr.bf16.mxu0 0
    %187 = vmatpush1.bf16.msra.mxu0 0
    %188 = vmatprep.subr.bf16.mxu0 0
    %189 = vmatpush1.bf16.msra.mxu0 0
    %190 = vmatprep.subr.bf16.mxu0 0
    %191 = vmatpush1.bf16.msra.mxu0 0
    %192 = vmatprep.subr.bf16.mxu0 0
    %193 = vmatpush1.bf16.msra.mxu0 0
    %194 = vmatprep.subr.bf16.mxu0 0
    %195 = vmatpush1.bf16.msra.mxu0 0
    %196 = vmatprep.subr.bf16.mxu0 0
    %197 = vmatpush1.bf16.msra.mxu0 0
    %198 = vmatprep.subr.bf16.mxu0 0
    %199 = vmatpush1.bf16.msra.mxu0 0
    %200 = vmatprep.subr.bf16.mxu0 0
    %201 = vmatpush1.bf16.msra.mxu0 0
    %202 = vmatprep.subr.bf16.mxu0 0
    %203 = vmatpush1.bf16.msra.mxu0 0
    %204 = vmatprep.subr.bf16.mxu0 0
    %205 = vmatpush1.bf16.msra.mxu0 0
    %206 = vmatprep.subr.bf16.mxu0 0
    %207 = vmatpush1.bf16.msra.mxu0 0
    %208 = vmatprep.subr.bf16.mxu0 0
    %209 = vmatpush1.bf16.msra.mxu0 0
    %210 = vmatprep.mubr.bf16.mxu0 0
    %211 = vmatmul.mubr.bf16.gmra.mrb[0].mxu0 %v135
    %v212 = vpop.f32.mrb[0].mxu0
    %v213 = vadd.f32 %v84, %v212
    %v214 = vpop.f32.mrb[0].mxu0
    %v215 = vadd.f32 %v88, %v214
    %v216 = vpop.f32.mrb[0].mxu0
    %v217 = vpop.f32.mrb[0].mxu0
    %218 = vdwg.mxu0
    %v219 = vmax.f32 %v172, 0.0
    %v220 = vmax.f32 %v174, 0.0
    %v221 = vmax.f32 %v213, 0.0
    %v222 = vmax.f32 %v215, 0.0
    %v223 = vpack.c.bf16 %v219, %v219
    %v224 = vpack.c.bf16 %v220, %v220
    %v225 = vpack.c.bf16 %v221, %v221
    %v226 = vpack.c.bf16 %v222, %v222
    %v227 = vld [vmem:[#allocation7] sm:$0xff]
    %v228 = vld [vmem:[#allocation7 + $0x8] sm:$0xff]
    %v229 = vld [vmem:[#allocation7 + $0x10] sm:$0xff]
    %v230 = vld [vmem:[#allocation7 + $0x18] sm:$0xf]
    %v231 = vld [vmem:[#allocation7 + $0x1c] sm:$0xff]
    %v232 = vld [vmem:[#allocation7 + $0x24] sm:$0xff]
    %v233 = vld [vmem:[#allocation7 + $0x2c] sm:$0xff]
    %v234 = vld [vmem:[#allocation7 + $0x34] sm:$0xf]
    %v235 = vld [vmem:[#allocation7 + $0x38] sm:$0xff]
    %v236 = vld [vmem:[#allocation7 + $0x40] sm:$0xff]
    %v237 = vld [vmem:[#allocation7 + $0x48] sm:$0xff]
    %v238 = vld [vmem:[#allocation7 + $0x50] sm:$0xf]
    %v239 = vld [vmem:[#allocation7 + $0x54] sm:$0xff]
    %v240 = vld [vmem:[#allocation7 + $0x5c] sm:$0xff]
    %v241 = vld [vmem:[#allocation7 + $0x64] sm:$0xff]
    %v242 = vld [vmem:[#allocation7 + $0x6c] sm:$0xf]
    %v243 = vld [vmem:[#allocation7 + $0x70] sm:$0xff]
    %v244 = vld [vmem:[#allocation7 + $0x78] sm:$0xff]
    %v245 = vld [vmem:[#allocation7 + $0x80] sm:$0xff]
    %v246 = vld [vmem:[#allocation7 + $0x88] sm:$0xf]
    %v247 = vld [vmem:[#allocation7 + $0x8c] sm:$0xff]
    %v248 = vld [vmem:[#allocation7 + $0x94] sm:$0xff]
    %v249 = vld [vmem:[#allocation7 + $0x9c] sm:$0xff]
    %v250 = vld [vmem:[#allocation7 + $0xa4] sm:$0xf]
    %v251 = vld [vmem:[#allocation7 + $0xa8] sm:$0xff]
    %v252 = vld [vmem:[#allocation7 + $0xb0] sm:$0xff]
    %v253 = vld [vmem:[#allocation7 + $0xb8] sm:$0xff]
    %v254 = vld [vmem:[#allocation7 + $0xc0] sm:$0xf]
    %v255 = vld [vmem:[#allocation7 + $0xc4] sm:$0xff]
    %v256 = vld [vmem:[#allocation7 + $0xcc] sm:$0xff]
    %v257 = vld [vmem:[#allocation7 + $0xd4] sm:$0xff]
    %v258 = vld [vmem:[#allocation7 + $0xdc] sm:$0xf]
    %v259 = vld [vmem:[#allocation7 + $0xe0] sm:$0xff]
    %v260 = vld [vmem:[#allocation7 + $0xe8] sm:$0xff]
    %v261 = vld [vmem:[#allocation7 + $0xf0] sm:$0xff]
    %v262 = vld [vmem:[#allocation7 + $0xf8] sm:$0xf]
    %v263 = vld [vmem:[#allocation7 + $0xfc] sm:$0xff]
    %v264 = vld [vmem:[#allocation7 + $0x104] sm:$0xff]
    %v265 = vld [vmem:[#allocation7 + $0x10c] sm:$0xff]
    %v266 = vld [vmem:[#allocation7 + $0x114] sm:$0xf]
    %v267 = vld [vmem:[#allocation7 + $0x118] sm:$0xff]
    %v268 = vld [vmem:[#allocation7 + $0x120] sm:$0xff]
    %v269 = vld [vmem:[#allocation7 + $0x128] sm:$0xff]
    %v270 = vld [vmem:[#allocation7 + $0x130] sm:$0xf]
    %v271 = vld [vmem:[#allocation7 + $0x134] sm:$0xff]
    %v272 = vld [vmem:[#allocation7 + $0x13c] sm:$0xff]
    %v273 = vld [vmem:[#allocation7 + $0x144] sm:$0xff]
    %v274 = vld [vmem:[#allocation7 + $0x14c] sm:$0xf]
    %v275 = vld [vmem:[#allocation7 + $0x150] sm:$0xff]
    %v276 = vld [vmem:[#allocation7 + $0x158] sm:$0xff]
    %v277 = vld [vmem:[#allocation7 + $0x160] sm:$0xff]
    %v278 = vld [vmem:[#allocation7 + $0x168] sm:$0xf]
    %v279 = vld [vmem:[#allocation7 + $0x16c] sm:$0xff]
    %v280 = vld [vmem:[#allocation7 + $0x174] sm:$0xff]
    %v281 = vld [vmem:[#allocation7 + $0x17c] sm:$0xff]
    %v282 = vld [vmem:[#allocation7 + $0x184] sm:$0xf]
    %v283 = vld [vmem:[#allocation7 + $0x188] sm:$0xff]
    %v284 = vld [vmem:[#allocation7 + $0x190] sm:$0xff]
    %v285 = vld [vmem:[#allocation7 + $0x198] sm:$0xff]
    %v286 = vld [vmem:[#allocation7 + $0x1a0] sm:$0xf]
    %v287 = vld [vmem:[#allocation7 + $0x1a4] sm:$0xff]
    %v288 = vld [vmem:[#allocation7 + $0x1ac] sm:$0xff]
    %v289 = vld [vmem:[#allocation7 + $0x1b4] sm:$0xff]
    %v290 = vld [vmem:[#allocation7 + $0x1bc] sm:$0xf]
    %v291 = vld [vmem:[#allocation7 + $0x1c0] sm:$0xff]
    %v292 = vld [vmem:[#allocation7 + $0x1c8] sm:$0xff]
    %v293 = vld [vmem:[#allocation7 + $0x1d0] sm:$0xff]
    %v294 = vld [vmem:[#allocation7 + $0x1d8] sm:$0xf]
    %v295 = vld [vmem:[#allocation7 + $0x1dc] sm:$0xff]
    %v296 = vld [vmem:[#allocation7 + $0x1e4] sm:$0xff]
    %v297 = vld [vmem:[#allocation7 + $0x1ec] sm:$0xff]
    %v298 = vld [vmem:[#allocation7 + $0x1f4] sm:$0xf]
    %v299 = vld [vmem:[#allocation7 + $0x1f8] sm:$0xff]
    %v300 = vld [vmem:[#allocation7 + $0x200] sm:$0xff]
    %v301 = vld [vmem:[#allocation7 + $0x208] sm:$0xff]
    %v302 = vld [vmem:[#allocation7 + $0x210] sm:$0xf]
    %v303 = vld [vmem:[#allocation7 + $0x214] sm:$0xff]
    %v304 = vld [vmem:[#allocation7 + $0x21c] sm:$0xff]
    %v305 = vld [vmem:[#allocation7 + $0x224] sm:$0xff]
    %v306 = vld [vmem:[#allocation7 + $0x22c] sm:$0xf]
    %v307 = vld [vmem:[#allocation7 + $0x230] sm:$0xff]
    %v308 = vld [vmem:[#allocation7 + $0x238] sm:$0xff]
    %v309 = vld [vmem:[#allocation7 + $0x240] sm:$0xff]
    %v310 = vld [vmem:[#allocation7 + $0x248] sm:$0xf]
    %v311 = vld [vmem:[#allocation7 + $0x24c] sm:$0xff]
    %v312 = vld [vmem:[#allocation7 + $0x254] sm:$0xff]
    %v313 = vld [vmem:[#allocation7 + $0x25c] sm:$0xff]
    %v314 = vld [vmem:[#allocation7 + $0x264] sm:$0xf]
    %v315 = vld [vmem:[#allocation7 + $0x268] sm:$0xff]
    %v316 = vld [vmem:[#allocation7 + $0x270] sm:$0xff]
    %v317 = vld [vmem:[#allocation7 + $0x278] sm:$0xff]
    %v318 = vld [vmem:[#allocation7 + $0x280] sm:$0xf]
    %v319 = vld [vmem:[#allocation7 + $0x284] sm:$0xff]
    %v320 = vld [vmem:[#allocation7 + $0x28c] sm:$0xff]
    %v321 = vld [vmem:[#allocation7 + $0x294] sm:$0xff]
    %v322 = vld [vmem:[#allocation7 + $0x29c] sm:$0xf]
    %v323 = vld [vmem:[#allocation7 + $0x2a0] sm:$0xff]
    %v324 = vld [vmem:[#allocation7 + $0x2a8] sm:$0xff]
    %v325 = vld [vmem:[#allocation7 + $0x2b0] sm:$0xff]
    %v326 = vld [vmem:[#allocation7 + $0x2b8] sm:$0xf]
    %v327 = vld [vmem:[#allocation7 + $0x2bc] sm:$0xff]
    %v328 = vld [vmem:[#allocation7 + $0x2c4] sm:$0xff]
    %v329 = vld [vmem:[#allocation7 + $0x2cc] sm:$0xff]
    %v330 = vld [vmem:[#allocation7 + $0x2d4] sm:$0xf]
    %v331 = vld [vmem:[#allocation7 + $0x2d8] sm:$0xff]
    %v332 = vld [vmem:[#allocation7 + $0x2e0] sm:$0xff]
    %v333 = vld [vmem:[#allocation7 + $0x2e8] sm:$0xff]
    %v334 = vld [vmem:[#allocation7 + $0x2f0] sm:$0xf]
    %v335 = vld [vmem:[#allocation7 + $0x2f4] sm:$0xff]
    %v336 = vld [vmem:[#allocation7 + $0x2fc] sm:$0xff]
    %v337 = vld [vmem:[#allocation7 + $0x304] sm:$0xff]
    %v338 = vld [vmem:[#allocation7 + $0x30c] sm:$0xf]
    %v339 = vld [vmem:[#allocation7 + $0x310] sm:$0xff]
    %v340 = vld [vmem:[#allocation7 + $0x318] sm:$0xff]
    %v341 = vld [vmem:[#allocation7 + $0x320] sm:$0xff]
    %v342 = vld [vmem:[#allocation7 + $0x328] sm:$0xf]
    %v343 = vld [vmem:[#allocation7 + $0x32c] sm:$0xff]
    %v344 = vld [vmem:[#allocation7 + $0x334] sm:$0xff]
    %v345 = vld [vmem:[#allocation7 + $0x33c] sm:$0xff]
    %v346 = vld [vmem:[#allocation7 + $0x344] sm:$0xf]
    %v347 = vld [vmem:[#allocation7 + $0x348] sm:$0xff]
    %v348 = vld [vmem:[#allocation7 + $0x350] sm:$0xff]
    %v349 = vld [vmem:[#allocation7 + $0x358] sm:$0xff]
    %v350 = vld [vmem:[#allocation7 + $0x360] sm:$0xf]
    %v351 = vld [vmem:[#allocation7 + $0x364] sm:$0xff]
    %v352 = vld [vmem:[#allocation7 + $0x36c] sm:$0xff]
    %v353 = vld [vmem:[#allocation7 + $0x374] sm:$0xff]
    %v354 = vld [vmem:[#allocation7 + $0x37c] sm:$0xf]
    %v355 = vld [vmem:[#allocation7 + $0x380] sm:$0xff]
    %v356 = vld [vmem:[#allocation7 + $0x388] sm:$0xff]
    %v357 = vld [vmem:[#allocation7 + $0x390] sm:$0xff]
    %v358 = vld [vmem:[#allocation7 + $0x398] sm:$0xf]
    %v359 = vld [vmem:[#allocation7 + $0x39c] sm:$0xff]
    %v360 = vld [vmem:[#allocation7 + $0x3a4] sm:$0xff]
    %v361 = vld [vmem:[#allocation7 + $0x3ac] sm:$0xff]
    %v362 = vld [vmem:[#allocation7 + $0x3b4] sm:$0xf]
    %v363 = vld [vmem:[#allocation7 + $0x3b8] sm:$0xff]
    %v364 = vld [vmem:[#allocation7 + $0x3c0] sm:$0xff]
    %v365 = vld [vmem:[#allocation7 + $0x3c8] sm:$0xff]
    %v366 = vld [vmem:[#allocation7 + $0x3d0] sm:$0xf]
    %v367 = vld [vmem:[#allocation7 + $0x3d4] sm:$0xff]
    %v368 = vld [vmem:[#allocation7 + $0x3dc] sm:$0xff]
    %v369 = vld [vmem:[#allocation7 + $0x3e4] sm:$0xff]
    %v370 = vld [vmem:[#allocation7 + $0x3ec] sm:$0xf]
    %v371 = vld [vmem:[#allocation7 + $0x3f0] sm:$0xff]
    %v372 = vld [vmem:[#allocation7 + $0x3f8] sm:$0xff]
    %v373 = vld [vmem:[#allocation7 + $0x400] sm:$0xff]
    %v374 = vld [vmem:[#allocation7 + $0x408] sm:$0xf]
    %v375 = vld [vmem:[#allocation7 + $0x40c] sm:$0xff]
    %v376 = vld [vmem:[#allocation7 + $0x414] sm:$0xff]
    %v377 = vld [vmem:[#allocation7 + $0x41c] sm:$0xff]
    %v378 = vld [vmem:[#allocation7 + $0x424] sm:$0xf]
    %v379 = vld [vmem:[#allocation7 + $0x428] sm:$0xff]
    %v380 = vld [vmem:[#allocation7 + $0x430] sm:$0xff]
    %v381 = vld [vmem:[#allocation7 + $0x438] sm:$0xff]
    %v382 = vld [vmem:[#allocation7 + $0x440] sm:$0xf]
    %v383 = vld [vmem:[#allocation7 + $0x444] sm:$0xff]
    %v384 = vld [vmem:[#allocation7 + $0x44c] sm:$0xff]
    %v385 = vld [vmem:[#allocation7 + $0x454] sm:$0xff]
    %v386 = vld [vmem:[#allocation7 + $0x45c] sm:$0xf]
    %v387 = vld [vmem:[#allocation7 + $0x460] sm:$0xff]
    %v388 = vld [vmem:[#allocation7 + $0x468] sm:$0xff]
    %v389 = vld [vmem:[#allocation7 + $0x470] sm:$0xff]
    %v390 = vld [vmem:[#allocation7 + $0x478] sm:$0xf]
    %v391 = vld [vmem:[#allocation7 + $0x47c] sm:$0xff]
    %v392 = vld [vmem:[#allocation7 + $0x484] sm:$0xff]
    %v393 = vld [vmem:[#allocation7 + $0x48c] sm:$0xff]
    %v394 = vld [vmem:[#allocation7 + $0x494] sm:$0xf]
    %v395 = vld [vmem:[#allocation7 + $0x498] sm:$0xff]
    %v396 = vld [vmem:[#allocation7 + $0x4a0] sm:$0xff]
    %v397 = vld [vmem:[#allocation7 + $0x4a8] sm:$0xff]
    %v398 = vld [vmem:[#allocation7 + $0x4b0] sm:$0xf]
    %v399 = vld [vmem:[#allocation7 + $0x4b4] sm:$0xff]
    %v400 = vld [vmem:[#allocation7 + $0x4bc] sm:$0xff]
    %v401 = vld [vmem:[#allocation7 + $0x4c4] sm:$0xff]
    %v402 = vld [vmem:[#allocation7 + $0x4cc] sm:$0xf]
    %v403 = vld [vmem:[#allocation7 + $0x4d0] sm:$0xff]
    %v404 = vld [vmem:[#allocation7 + $0x4d8] sm:$0xff]
    %v405 = vld [vmem:[#allocation7 + $0x4e0] sm:$0xff]
    %v406 = vld [vmem:[#allocation7 + $0x4e8] sm:$0xf]
    %v407 = vld [vmem:[#allocation7 + $0x4ec] sm:$0xff]
    %v408 = vld [vmem:[#allocation7 + $0x4f4] sm:$0xff]
    %v409 = vld [vmem:[#allocation7 + $0x4fc] sm:$0xff]
    %v410 = vld [vmem:[#allocation7 + $0x504] sm:$0xf]
    %v411 = vld [vmem:[#allocation7 + $0x508] sm:$0xff]
    %v412 = vld [vmem:[#allocation7 + $0x510] sm:$0xff]
    %v413 = vld [vmem:[#allocation7 + $0x518] sm:$0xff]
    %v414 = vld [vmem:[#allocation7 + $0x520] sm:$0xf]
    %v415 = vld [vmem:[#allocation7 + $0x524] sm:$0xff]
    %v416 = vld [vmem:[#allocation7 + $0x52c] sm:$0xff]
    %v417 = vld [vmem:[#allocation7 + $0x534] sm:$0xff]
    %v418 = vld [vmem:[#allocation7 + $0x53c] sm:$0xf]
    %v419 = vld [vmem:[#allocation7 + $0x540] sm:$0xff]
    %v420 = vld [vmem:[#allocation7 + $0x548] sm:$0xff]
    %v421 = vld [vmem:[#allocation7 + $0x550] sm:$0xff]
    %v422 = vld [vmem:[#allocation7 + $0x558] sm:$0xf]
    %v423 = vld [vmem:[#allocation7 + $0x55c] sm:$0xff]
    %v424 = vld [vmem:[#allocation7 + $0x564] sm:$0xff]
    %v425 = vld [vmem:[#allocation7 + $0x56c] sm:$0xff]
    %v426 = vld [vmem:[#allocation7 + $0x574] sm:$0xf]
    %v427 = vld [vmem:[#allocation7 + $0x578] sm:$0xff]
    %v428 = vld [vmem:[#allocation7 + $0x580] sm:$0xff]
    %v429 = vld [vmem:[#allocation7 + $0x588] sm:$0xff]
    %v430 = vld [vmem:[#allocation7 + $0x590] sm:$0xf]
    %v431 = vld [vmem:[#allocation7 + $0x594] sm:$0xff]
    %v432 = vld [vmem:[#allocation7 + $0x59c] sm:$0xff]
    %v433 = vld [vmem:[#allocation7 + $0x5a4] sm:$0xff]
    %v434 = vld [vmem:[#allocation7 + $0x5ac] sm:$0xf]
    %v435 = vld [vmem:[#allocation7 + $0x5b0] sm:$0xff]
    %v436 = vld [vmem:[#allocation7 + $0x5b8] sm:$0xff]
    %v437 = vld [vmem:[#allocation7 + $0x5c0] sm:$0xff]
    %v438 = vld [vmem:[#allocation7 + $0x5c8] sm:$0xf]
    %v439 = vld [vmem:[#allocation7 + $0x5cc] sm:$0xff]
    %v440 = vld [vmem:[#allocation7 + $0x5d4] sm:$0xff]
    %v441 = vld [vmem:[#allocation7 + $0x5dc] sm:$0xff]
    %v442 = vld [vmem:[#allocation7 + $0x5e4] sm:$0xf]
    %v443 = vld [vmem:[#allocation7 + $0x5e8] sm:$0xff]
    %v444 = vld [vmem:[#allocation7 + $0x5f0] sm:$0xff]
    %v445 = vld [vmem:[#allocation7 + $0x5f8] sm:$0xff]
    %v446 = vld [vmem:[#allocation7 + $0x600] sm:$0xf]
    %v447 = vld [vmem:[#allocation7 + $0x604] sm:$0xff]
    %v448 = vld [vmem:[#allocation7 + $0x60c] sm:$0xff]
    %v449 = vld [vmem:[#allocation7 + $0x614] sm:$0xff]
    %v450 = vld [vmem:[#allocation7 + $0x61c] sm:$0xf]
    %v451 = vld [vmem:[#allocation7 + $0x620] sm:$0xff]
    %v452 = vld [vmem:[#allocation7 + $0x628] sm:$0xff]
    %v453 = vld [vmem:[#allocation7 + $0x630] sm:$0xff]
    %v454 = vld [vmem:[#allocation7 + $0x638] sm:$0xf]
    %v455 = vld [vmem:[#allocation7 + $0x63c] sm:$0xff]
    %v456 = vld [vmem:[#allocation7 + $0x644] sm:$0xff]
    %v457 = vld [vmem:[#allocation7 + $0x64c] sm:$0xff]
    %v458 = vld [vmem:[#allocation7 + $0x654] sm:$0xf]
    %v459 = vld [vmem:[#allocation7 + $0x658] sm:$0xff]
    %v460 = vld [vmem:[#allocation7 + $0x660] sm:$0xff]
    %v461 = vld [vmem:[#allocation7 + $0x668] sm:$0xff]
    %v462 = vld [vmem:[#allocation7 + $0x670] sm:$0xf]
    %v463 = vld [vmem:[#allocation7 + $0x674] sm:$0xff]
    %v464 = vld [vmem:[#allocation7 + $0x67c] sm:$0xff]
    %v465 = vld [vmem:[#allocation7 + $0x684] sm:$0xff]
    %v466 = vld [vmem:[#allocation7 + $0x68c] sm:$0xf]
    %v467 = vld [vmem:[#allocation7 + $0x690] sm:$0xff]
    %v468 = vld [vmem:[#allocation7 + $0x698] sm:$0xff]
    %v469 = vld [vmem:[#allocation7 + $0x6a0] sm:$0xff]
    %v470 = vld [vmem:[#allocation7 + $0x6a8] sm:$0xf]
    %v471 = vld [vmem:[#allocation7 + $0x6ac] sm:$0xff]
    %v472 = vld [vmem:[#allocation7 + $0x6b4] sm:$0xff]
    %v473 = vld [vmem:[#allocation7 + $0x6bc] sm:$0xff]
    %v474 = vld [vmem:[#allocation7 + $0x6c4] sm:$0xf]
    %v475 = vld [vmem:[#allocation7 + $0x6c8] sm:$0xff]
    %v476 = vld [vmem:[#allocation7 + $0x6d0] sm:$0xff]
    %v477 = vld [vmem:[#allocation7 + $0x6d8] sm:$0xff]
    %v478 = vld [vmem:[#allocation7 + $0x6e0] sm:$0xf]
    %v479 = vld [vmem:[#allocation7 + $0x6e4] sm:$0xff]
    %v480 = vld [vmem:[#allocation7 + $0x6ec] sm:$0xff]
    %v481 = vld [vmem:[#allocation7 + $0x6f4] sm:$0xff]
    %v482 = vld [vmem:[#allocation7 + $0x6fc] sm:$0xf]
    %v483 = vld [vmem:[%s4] sm:$0xff]
    %v485 = vlaneseq
    %v486 = vshrl.u32 %v485, 7
    %v487 = vsub.s32 0, %v486
    %v488 = vrot.slane %v483, %v487
    %v489 = vlaneseq
    %v490 = vshrl.u32 %v489, 7
    %v491 = vsub.s32 1, %v490
    %v492 = vrot.slane %v483, %v491
    %v493 = vlaneseq
    %v494 = vshrl.u32 %v493, 7
    %v495 = vsub.s32 2, %v494
    %v496 = vrot.slane %v483, %v495
    %v497 = vlaneseq
    %v498 = vshrl.u32 %v497, 7
    %v499 = vsub.s32 3, %v498
    %v500 = vrot.slane %v483, %v499
    %v501 = vlaneseq
    %v502 = vshrl.u32 %v501, 7
    %v503 = vsub.s32 4, %v502
    %v504 = vrot.slane %v483, %v503
    %v505 = vlaneseq
    %v506 = vshrl.u32 %v505, 7
    %v507 = vsub.s32 5, %v506
    %v508 = vrot.slane %v483, %v507
    %v509 = vlaneseq
    %v510 = vshrl.u32 %v509, 7
    %v511 = vsub.s32 6, %v510
    %v512 = vrot.slane %v483, %v511
    %v776 = vunpack.c.l.b16 %v227
    %v777 = vunpack.c.h.b16 %v227
    %v778 = vunpack.c.l.b16 %v228
    %v779 = vunpack.c.h.b16 %v228
    %v780 = vunpack.c.l.b16 %v229
    %v781 = vunpack.c.h.b16 %v229
    %v782 = vunpack.c.l.b16 %v230
    %v783 = vunpack.c.l.b16 %v231
    %v784 = vunpack.c.h.b16 %v231
    %v785 = vunpack.c.l.b16 %v232
    %v786 = vunpack.c.h.b16 %v232
    %v787 = vunpack.c.l.b16 %v233
    %v788 = vunpack.c.h.b16 %v233
    %v789 = vunpack.c.l.b16 %v234
    %v790 = vunpack.c.l.b16 %v235
    %v791 = vunpack.c.h.b16 %v235
    %v792 = vunpack.c.l.b16 %v236
    %v793 = vunpack.c.h.b16 %v236
    %v794 = vunpack.c.l.b16 %v237
    %v795 = vunpack.c.h.b16 %v237
    %v796 = vunpack.c.l.b16 %v238
    %v797 = vunpack.c.l.b16 %v239
    %v798 = vunpack.c.h.b16 %v239
    %v799 = vunpack.c.l.b16 %v240
    %v800 = vunpack.c.h.b16 %v240
    %v801 = vunpack.c.l.b16 %v241
    %v802 = vunpack.c.h.b16 %v241
    %v803 = vunpack.c.l.b16 %v242
    %v804 = vunpack.c.l.b16 %v243
    %v805 = vunpack.c.h.b16 %v243
    %v806 = vunpack.c.l.b16 %v244
    %v807 = vunpack.c.h.b16 %v244
    %v808 = vunpack.c.l.b16 %v245
    %v809 = vunpack.c.h.b16 %v245
    %v810 = vunpack.c.l.b16 %v246
    %v811 = vunpack.c.l.b16 %v247
    %v812 = vunpack.c.h.b16 %v247
    %v813 = vunpack.c.l.b16 %v248
    %v814 = vunpack.c.h.b16 %v248
    %v815 = vunpack.c.l.b16 %v249
    %v816 = vunpack.c.h.b16 %v249
    %v817 = vunpack.c.l.b16 %v250
    %v818 = vunpack.c.l.b16 %v251
    %v819 = vunpack.c.h.b16 %v251
    %v820 = vunpack.c.l.b16 %v252
    %v821 = vunpack.c.h.b16 %v252
    %v822 = vunpack.c.l.b16 %v253
    %v823 = vunpack.c.h.b16 %v253
    %v824 = vunpack.c.l.b16 %v254
    %v825 = vunpack.c.l.b16 %v255
    %v826 = vunpack.c.h.b16 %v255
    %v827 = vunpack.c.l.b16 %v256
    %v828 = vunpack.c.h.b16 %v256
    %v829 = vunpack.c.l.b16 %v257
    %v830 = vunpack.c.h.b16 %v257
    %v831 = vunpack.c.l.b16 %v258
    %v832 = vunpack.c.l.b16 %v259
    %v833 = vunpack.c.h.b16 %v259
    %v834 = vunpack.c.l.b16 %v260
    %v835 = vunpack.c.h.b16 %v260
    %v836 = vunpack.c.l.b16 %v261
    %v837 = vunpack.c.h.b16 %v261
    %v838 = vunpack.c.l.b16 %v262
    %v839 = vunpack.c.l.b16 %v263
    %v840 = vunpack.c.h.b16 %v263
    %v841 = vunpack.c.l.b16 %v264
    %v842 = vunpack.c.h.b16 %v264
    %v843 = vunpack.c.l.b16 %v265
    %v844 = vunpack.c.h.b16 %v265
    %v845 = vunpack.c.l.b16 %v266
    %v846 = vunpack.c.l.b16 %v267
    %v847 = vunpack.c.h.b16 %v267
    %v848 = vunpack.c.l.b16 %v268
    %v849 = vunpack.c.h.b16 %v268
    %v850 = vunpack.c.l.b16 %v269
    %v851 = vunpack.c.h.b16 %v269
    %v852 = vunpack.c.l.b16 %v270
    %v853 = vunpack.c.l.b16 %v271
    %v854 = vunpack.c.h.b16 %v271
    %v855 = vunpack.c.l.b16 %v272
    %v856 = vunpack.c.h.b16 %v272
    %v857 = vunpack.c.l.b16 %v273
    %v858 = vunpack.c.h.b16 %v273
    %v859 = vunpack.c.l.b16 %v274
    %v860 = vunpack.c.l.b16 %v275
    %v861 = vunpack.c.h.b16 %v275
    %v862 = vunpack.c.l.b16 %v276
    %v863 = vunpack.c.h.b16 %v276
    %v864 = vunpack.c.l.b16 %v277
    %v865 = vunpack.c.h.b16 %v277
    %v866 = vunpack.c.l.b16 %v278
    %v867 = vunpack.c.l.b16 %v279
    %v868 = vunpack.c.h.b16 %v279
    %v869 = vunpack.c.l.b16 %v280
    %v870 = vunpack.c.h.b16 %v280
    %v871 = vunpack.c.l.b16 %v281
    %v872 = vunpack.c.h.b16 %v281
    %v873 = vunpack.c.l.b16 %v282
    %v874 = vunpack.c.l.b16 %v283
    %v875 = vunpack.c.h.b16 %v283
    %v876 = vunpack.c.l.b16 %v284
    %v877 = vunpack.c.h.b16 %v284
    %v878 = vunpack.c.l.b16 %v285
    %v879 = vunpack.c.h.b16 %v285
    %v880 = vunpack.c.l.b16 %v286
    %v881 = vunpack.c.l.b16 %v287
    %v882 = vunpack.c.h.b16 %v287
    %v883 = vunpack.c.l.b16 %v288
    %v884 = vunpack.c.h.b16 %v288
    %v885 = vunpack.c.l.b16 %v289
    %v886 = vunpack.c.h.b16 %v289
    %v887 = vunpack.c.l.b16 %v290
    %v888 = vunpack.c.l.b16 %v291
    %v889 = vunpack.c.h.b16 %v291
    %v890 = vunpack.c.l.b16 %v292
    %v891 = vunpack.c.h.b16 %v292
    %v892 = vunpack.c.l.b16 %v293
    %v893 = vunpack.c.h.b16 %v293
    %v894 = vunpack.c.l.b16 %v294
    %v895 = vunpack.c.l.b16 %v295
    %v896 = vunpack.c.h.b16 %v295
    %v897 = vunpack.c.l.b16 %v296
    %v898 = vunpack.c.h.b16 %v296
    %v899 = vunpack.c.l.b16 %v297
    %v900 = vunpack.c.h.b16 %v297
    %v901 = vunpack.c.l.b16 %v298
    %v902 = vunpack.c.l.b16 %v299
    %v903 = vunpack.c.h.b16 %v299
    %v904 = vunpack.c.l.b16 %v300
    %v905 = vunpack.c.h.b16 %v300
    %v906 = vunpack.c.l.b16 %v301
    %v907 = vunpack.c.h.b16 %v301
    %v908 = vunpack.c.l.b16 %v302
    %v909 = vunpack.c.l.b16 %v303
    %v910 = vunpack.c.h.b16 %v303
    %v911 = vunpack.c.l.b16 %v304
    %v912 = vunpack.c.h.b16 %v304
    %v913 = vunpack.c.l.b16 %v305
    %v914 = vunpack.c.h.b16 %v305
    %v915 = vunpack.c.l.b16 %v306
    %v916 = vunpack.c.l.b16 %v307
    %v917 = vunpack.c.h.b16 %v307
    %v918 = vunpack.c.l.b16 %v308
    %v919 = vunpack.c.h.b16 %v308
    %v920 = vunpack.c.l.b16 %v309
    %v921 = vunpack.c.h.b16 %v309
    %v922 = vunpack.c.l.b16 %v310
    %v923 = vunpack.c.l.b16 %v311
    %v924 = vunpack.c.h.b16 %v311
    %v925 = vunpack.c.l.b16 %v312
    %v926 = vunpack.c.h.b16 %v312
    %v927 = vunpack.c.l.b16 %v313
    %v928 = vunpack.c.h.b16 %v313
    %v929 = vunpack.c.l.b16 %v314
    %v930 = vunpack.c.l.b16 %v315
    %v931 = vunpack.c.h.b16 %v315
    %v932 = vunpack.c.l.b16 %v316
    %v933 = vunpack.c.h.b16 %v316
    %v934 = vunpack.c.l.b16 %v317
    %v935 = vunpack.c.h.b16 %v317
    %v936 = vunpack.c.l.b16 %v318
    %v937 = vunpack.c.l.b16 %v319
    %v938 = vunpack.c.h.b16 %v319
    %v939 = vunpack.c.l.b16 %v320
    %v940 = vunpack.c.h.b16 %v320
    %v941 = vunpack.c.l.b16 %v321
    %v942 = vunpack.c.h.b16 %v321
    %v943 = vunpack.c.l.b16 %v322
    %v944 = vunpack.c.l.b16 %v323
    %v945 = vunpack.c.h.b16 %v323
    %v946 = vunpack.c.l.b16 %v324
    %v947 = vunpack.c.h.b16 %v324
    %v948 = vunpack.c.l.b16 %v325
    %v949 = vunpack.c.h.b16 %v325
    %v950 = vunpack.c.l.b16 %v326
    %v951 = vunpack.c.l.b16 %v327
    %v952 = vunpack.c.h.b16 %v327
    %v953 = vunpack.c.l.b16 %v328
    %v954 = vunpack.c.h.b16 %v328
    %v955 = vunpack.c.l.b16 %v329
    %v956 = vunpack.c.h.b16 %v329
    %v957 = vunpack.c.l.b16 %v330
    %v958 = vunpack.c.l.b16 %v331
    %v959 = vunpack.c.h.b16 %v331
    %v960 = vunpack.c.l.b16 %v332
    %v961 = vunpack.c.h.b16 %v332
    %v962 = vunpack.c.l.b16 %v333
    %v963 = vunpack.c.h.b16 %v333
    %v964 = vunpack.c.l.b16 %v334
    %v965 = vunpack.c.l.b16 %v335
    %v966 = vunpack.c.h.b16 %v335
    %v967 = vunpack.c.l.b16 %v336
    %v968 = vunpack.c.h.b16 %v336
    %v969 = vunpack.c.l.b16 %v337
    %v970 = vunpack.c.h.b16 %v337
    %v971 = vunpack.c.l.b16 %v338
    %v972 = vunpack.c.l.b16 %v339
    %v973 = vunpack.c.h.b16 %v339
    %v974 = vunpack.c.l.b16 %v340
    %v975 = vunpack.c.h.b16 %v340
    %v976 = vunpack.c.l.b16 %v341
    %v977 = vunpack.c.h.b16 %v341
    %v978 = vunpack.c.l.b16 %v342
    %v979 = vunpack.c.l.b16 %v343
    %v980 = vunpack.c.h.b16 %v343
    %v981 = vunpack.c.l.b16 %v344
    %v982 = vunpack.c.h.b16 %v344
    %v983 = vunpack.c.l.b16 %v345
    %v984 = vunpack.c.h.b16 %v345
    %v985 = vunpack.c.l.b16 %v346
    %v986 = vunpack.c.l.b16 %v347
    %v987 = vunpack.c.h.b16 %v347
    %v988 = vunpack.c.l.b16 %v348
    %v989 = vunpack.c.h.b16 %v348
    %v990 = vunpack.c.l.b16 %v349
    %v991 = vunpack.c.h.b16 %v349
    %v992 = vunpack.c.l.b16 %v350
    %v993 = vunpack.c.l.b16 %v351
    %v994 = vunpack.c.h.b16 %v351
    %v995 = vunpack.c.l.b16 %v352
    %v996 = vunpack.c.h.b16 %v352
    %v997 = vunpack.c.l.b16 %v353
    %v998 = vunpack.c.h.b16 %v353
    %v999 = vunpack.c.l.b16 %v354
    %v1000 = vunpack.c.l.b16 %v355
    %v1001 = vunpack.c.h.b16 %v355
    %v1002 = vunpack.c.l.b16 %v356
    %v1003 = vunpack.c.h.b16 %v356
    %v1004 = vunpack.c.l.b16 %v357
    %v1005 = vunpack.c.h.b16 %v357
    %v1006 = vunpack.c.l.b16 %v358
    %v1007 = vunpack.c.l.b16 %v359
    %v1008 = vunpack.c.h.b16 %v359
    %v1009 = vunpack.c.l.b16 %v360
    %v1010 = vunpack.c.h.b16 %v360
    %v1011 = vunpack.c.l.b16 %v361
    %v1012 = vunpack.c.h.b16 %v361
    %v1013 = vunpack.c.l.b16 %v362
    %v1014 = vunpack.c.l.b16 %v363
    %v1015 = vunpack.c.h.b16 %v363
    %v1016 = vunpack.c.l.b16 %v364
    %v1017 = vunpack.c.h.b16 %v364
    %v1018 = vunpack.c.l.b16 %v365
    %v1019 = vunpack.c.h.b16 %v365
    %v1020 = vunpack.c.l.b16 %v366
    %v1021 = vunpack.c.l.b16 %v367
    %v1022 = vunpack.c.h.b16 %v367
    %v1023 = vunpack.c.l.b16 %v368
    %v1024 = vunpack.c.h.b16 %v368
    %v1025 = vunpack.c.l.b16 %v369
    %v1026 = vunpack.c.h.b16 %v369
    %v1027 = vunpack.c.l.b16 %v370
    %v1028 = vunpack.c.l.b16 %v371
    %v1029 = vunpack.c.h.b16 %v371
    %v1030 = vunpack.c.l.b16 %v372
    %v1031 = vunpack.c.h.b16 %v372
    %v1032 = vunpack.c.l.b16 %v373
    %v1033 = vunpack.c.h.b16 %v373
    %v1034 = vunpack.c.l.b16 %v374
    %v1035 = vunpack.c.l.b16 %v375
    %v1036 = vunpack.c.h.b16 %v375
    %v1037 = vunpack.c.l.b16 %v376
    %v1038 = vunpack.c.h.b16 %v376
    %v1039 = vunpack.c.l.b16 %v377
    %v1040 = vunpack.c.h.b16 %v377
    %v1041 = vunpack.c.l.b16 %v378
    %v1042 = vunpack.c.l.b16 %v379
    %v1043 = vunpack.c.h.b16 %v379
    %v1044 = vunpack.c.l.b16 %v380
    %v1045 = vunpack.c.h.b16 %v380
    %v1046 = vunpack.c.l.b16 %v381
    %v1047 = vunpack.c.h.b16 %v381
    %v1048 = vunpack.c.l.b16 %v382
    %v1049 = vunpack.c.l.b16 %v383
    %v1050 = vunpack.c.h.b16 %v383
    %v1051 = vunpack.c.l.b16 %v384
    %v1052 = vunpack.c.h.b16 %v384
    %v1053 = vunpack.c.l.b16 %v385
    %v1054 = vunpack.c.h.b16 %v385
    %v1055 = vunpack.c.l.b16 %v386
    %v1056 = vunpack.c.l.b16 %v387
    %v1057 = vunpack.c.h.b16 %v387
    %v1058 = vunpack.c.l.b16 %v388
    %v1059 = vunpack.c.h.b16 %v388
    %v1060 = vunpack.c.l.b16 %v389
    %v1061 = vunpack.c.h.b16 %v389
    %v1062 = vunpack.c.l.b16 %v390
    %v1063 = vunpack.c.l.b16 %v391
    %v1064 = vunpack.c.h.b16 %v391
    %v1065 = vunpack.c.l.b16 %v392
    %v1066 = vunpack.c.h.b16 %v392
    %v1067 = vunpack.c.l.b16 %v393
    %v1068 = vunpack.c.h.b16 %v393
    %v1069 = vunpack.c.l.b16 %v394
    %v1070 = vunpack.c.l.b16 %v395
    %v1071 = vunpack.c.h.b16 %v395
    %v1072 = vunpack.c.l.b16 %v396
    %v1073 = vunpack.c.h.b16 %v396
    %v1074 = vunpack.c.l.b16 %v397
    %v1075 = vunpack.c.h.b16 %v397
    %v1076 = vunpack.c.l.b16 %v398
    %v1077 = vunpack.c.l.b16 %v399
    %v1078 = vunpack.c.h.b16 %v399
    %v1079 = vunpack.c.l.b16 %v400
    %v1080 = vunpack.c.h.b16 %v400
    %v1081 = vunpack.c.l.b16 %v401
    %v1082 = vunpack.c.h.b16 %v401
    %v1083 = vunpack.c.l.b16 %v402
    %v1084 = vunpack.c.l.b16 %v403
    %v1085 = vunpack.c.h.b16 %v403
    %v1086 = vunpack.c.l.b16 %v404
    %v1087 = vunpack.c.h.b16 %v404
    %v1088 = vunpack.c.l.b16 %v405
    %v1089 = vunpack.c.h.b16 %v405
    %v1090 = vunpack.c.l.b16 %v406
    %v1091 = vunpack.c.l.b16 %v407
    %v1092 = vunpack.c.h.b16 %v407
    %v1093 = vunpack.c.l.b16 %v408
    %v1094 = vunpack.c.h.b16 %v408
    %v1095 = vunpack.c.l.b16 %v409
    %v1096 = vunpack.c.h.b16 %v409
    %v1097 = vunpack.c.l.b16 %v410
    %v1098 = vunpack.c.l.b16 %v411
    %v1099 = vunpack.c.h.b16 %v411
    %v1100 = vunpack.c.l.b16 %v412
    %v1101 = vunpack.c.h.b16 %v412
    %v1102 = vunpack.c.l.b16 %v413
    %v1103 = vunpack.c.h.b16 %v413
    %v1104 = vunpack.c.l.b16 %v414
    %v1105 = vunpack.c.l.b16 %v415
    %v1106 = vunpack.c.h.b16 %v415
    %v1107 = vunpack.c.l.b16 %v416
    %v1108 = vunpack.c.h.b16 %v416
    %v1109 = vunpack.c.l.b16 %v417
    %v1110 = vunpack.c.h.b16 %v417
    %v1111 = vunpack.c.l.b16 %v418
    %v1112 = vunpack.c.l.b16 %v419
    %v1113 = vunpack.c.h.b16 %v419
    %v1114 = vunpack.c.l.b16 %v420
    %v1115 = vunpack.c.h.b16 %v420
    %v1116 = vunpack.c.l.b16 %v421
    %v1117 = vunpack.c.h.b16 %v421
    %v1118 = vunpack.c.l.b16 %v422
    %v1119 = vunpack.c.l.b16 %v423
    %v1120 = vunpack.c.h.b16 %v423
    %v1121 = vunpack.c.l.b16 %v424
    %v1122 = vunpack.c.h.b16 %v424
    %v1123 = vunpack.c.l.b16 %v425
    %v1124 = vunpack.c.h.b16 %v425
    %v1125 = vunpack.c.l.b16 %v426
    %v1126 = vunpack.c.l.b16 %v427
    %v1127 = vunpack.c.h.b16 %v427
    %v1128 = vunpack.c.l.b16 %v428
    %v1129 = vunpack.c.h.b16 %v428
    %v1130 = vunpack.c.l.b16 %v429
    %v1131 = vunpack.c.h.b16 %v429
    %v1132 = vunpack.c.l.b16 %v430
    %v1133 = vunpack.c.l.b16 %v431
    %v1134 = vunpack.c.h.b16 %v431
    %v1135 = vunpack.c.l.b16 %v432
    %v1136 = vunpack.c.h.b16 %v432
    %v1137 = vunpack.c.l.b16 %v433
    %v1138 = vunpack.c.h.b16 %v433
    %v1139 = vunpack.c.l.b16 %v434
    %v1140 = vunpack.c.l.b16 %v435
    %v1141 = vunpack.c.h.b16 %v435
    %v1142 = vunpack.c.l.b16 %v436
    %v1143 = vunpack.c.h.b16 %v436
    %v1144 = vunpack.c.l.b16 %v437
    %v1145 = vunpack.c.h.b16 %v437
    %v1146 = vunpack.c.l.b16 %v438
    %v1147 = vunpack.c.l.b16 %v439
    %v1148 = vunpack.c.h.b16 %v439
    %v1149 = vunpack.c.l.b16 %v440
    %v1150 = vunpack.c.h.b16 %v440
    %v1151 = vunpack.c.l.b16 %v441
    %v1152 = vunpack.c.h.b16 %v441
    %v1153 = vunpack.c.l.b16 %v442
    %v1154 = vunpack.c.l.b16 %v443
    %v1155 = vunpack.c.h.b16 %v443
    %v1156 = vunpack.c.l.b16 %v444
    %v1157 = vunpack.c.h.b16 %v444
    %v1158 = vunpack.c.l.b16 %v445
    %v1159 = vunpack.c.h.b16 %v445
    %v1160 = vunpack.c.l.b16 %v446
    %v1161 = vunpack.c.l.b16 %v447
    %v1162 = vunpack.c.h.b16 %v447
    %v1163 = vunpack.c.l.b16 %v448
    %v1164 = vunpack.c.h.b16 %v448
    %v1165 = vunpack.c.l.b16 %v449
    %v1166 = vunpack.c.h.b16 %v449
    %v1167 = vunpack.c.l.b16 %v450
    %v1168 = vunpack.c.l.b16 %v451
    %v1169 = vunpack.c.h.b16 %v451
    %v1170 = vunpack.c.l.b16 %v452
    %v1171 = vunpack.c.h.b16 %v452
    %v1172 = vunpack.c.l.b16 %v453
    %v1173 = vunpack.c.h.b16 %v453
    %v1174 = vunpack.c.l.b16 %v454
    %v1175 = vunpack.c.l.b16 %v455
    %v1176 = vunpack.c.h.b16 %v455
    %v1177 = vunpack.c.l.b16 %v456
    %v1178 = vunpack.c.h.b16 %v456
    %v1179 = vunpack.c.l.b16 %v457
    %v1180 = vunpack.c.h.b16 %v457
    %v1181 = vunpack.c.l.b16 %v458
    %v1182 = vunpack.c.l.b16 %v459
    %v1183 = vunpack.c.h.b16 %v459
    %v1184 = vunpack.c.l.b16 %v460
    %v1185 = vunpack.c.h.b16 %v460
    %v1186 = vunpack.c.l.b16 %v461
    %v1187 = vunpack.c.h.b16 %v461
    %v1188 = vunpack.c.l.b16 %v462
    %v1189 = vunpack.c.l.b16 %v463
    %v1190 = vunpack.c.h.b16 %v463
    %v1191 = vunpack.c.l.b16 %v464
    %v1192 = vunpack.c.h.b16 %v464
    %v1193 = vunpack.c.l.b16 %v465
    %v1194 = vunpack.c.h.b16 %v465
    %v1195 = vunpack.c.l.b16 %v466
    %v1196 = vunpack.c.l.b16 %v467
    %v1197 = vunpack.c.h.b16 %v467
    %v1198 = vunpack.c.l.b16 %v468
    %v1199 = vunpack.c.h.b16 %v468
    %v1200 = vunpack.c.l.b16 %v469
    %v1201 = vunpack.c.h.b16 %v469
    %v1202 = vunpack.c.l.b16 %v470
    %v1203 = vunpack.c.l.b16 %v471
    %v1204 = vunpack.c.h.b16 %v471
    %v1205 = vunpack.c.l.b16 %v472
    %v1206 = vunpack.c.h.b16 %v472
    %v1207 = vunpack.c.l.b16 %v473
    %v1208 = vunpack.c.h.b16 %v473
    %v1209 = vunpack.c.l.b16 %v474
    %v1210 = vunpack.c.l.b16 %v475
    %v1211 = vunpack.c.h.b16 %v475
    %v1212 = vunpack.c.l.b16 %v476
    %v1213 = vunpack.c.h.b16 %v476
    %v1214 = vunpack.c.l.b16 %v477
    %v1215 = vunpack.c.h.b16 %v477
    %v1216 = vunpack.c.l.b16 %v478
    %v1217 = vunpack.c.l.b16 %v479
    %v1218 = vunpack.c.h.b16 %v479
    %v1219 = vunpack.c.l.b16 %v480
    %v1220 = vunpack.c.h.b16 %v480
    %v1221 = vunpack.c.l.b16 %v481
    %v1222 = vunpack.c.h.b16 %v481
    %v1223 = vunpack.c.l.b16 %v482
    %v1224 = vpack.c.b16 %v783, %v776
    %v1225 = vpack.c.b16 %v784, %v777
    %v1226 = vpack.c.b16 %v785, %v778
    %v1227 = vpack.c.b16 %v786, %v779
    %v1228 = vpack.c.b16 %v787, %v780
    %v1229 = vpack.c.b16 %v788, %v781
    %v1230 = vpack.c.b16 %v789, %v782
    %v1231 = vpack.c.b16 %v797, %v790
    %v1232 = vpack.c.b16 %v798, %v791
    %v1233 = vpack.c.b16 %v799, %v792
    %v1234 = vpack.c.b16 %v800, %v793
    %v1235 = vpack.c.b16 %v801, %v794
    %v1236 = vpack.c.b16 %v802, %v795
    %v1237 = vpack.c.b16 %v803, %v796
    %v1238 = vpack.c.b16 %v811, %v804
    %v1239 = vpack.c.b16 %v812, %v805
    %v1240 = vpack.c.b16 %v813, %v806
    %v1241 = vpack.c.b16 %v814, %v807
    %v1242 = vpack.c.b16 %v815, %v808
    %v1243 = vpack.c.b16 %v816, %v809
    %v1244 = vpack.c.b16 %v817, %v810
    %v1245 = vpack.c.b16 %v825, %v818
    %v1246 = vpack.c.b16 %v826, %v819
    %v1247 = vpack.c.b16 %v827, %v820
    %v1248 = vpack.c.b16 %v828, %v821
    %v1249 = vpack.c.b16 %v829, %v822
    %v1250 = vpack.c.b16 %v830, %v823
    %v1251 = vpack.c.b16 %v831, %v824
    %v1252 = vpack.c.b16 %v839, %v832
    %v1253 = vpack.c.b16 %v840, %v833
    %v1254 = vpack.c.b16 %v841, %v834
    %v1255 = vpack.c.b16 %v842, %v835
    %v1256 = vpack.c.b16 %v843, %v836
    %v1257 = vpack.c.b16 %v844, %v837
    %v1258 = vpack.c.b16 %v845, %v838
    %v1259 = vpack.c.b16 %v853, %v846
    %v1260 = vpack.c.b16 %v854, %v847
    %v1261 = vpack.c.b16 %v855, %v848
    %v1262 = vpack.c.b16 %v856, %v849
    %v1263 = vpack.c.b16 %v857, %v850
    %v1264 = vpack.c.b16 %v858, %v851
    %v1265 = vpack.c.b16 %v859, %v852
    %v1266 = vpack.c.b16 %v867, %v860
    %v1267 = vpack.c.b16 %v868, %v861
    %v1268 = vpack.c.b16 %v869, %v862
    %v1269 = vpack.c.b16 %v870, %v863
    %v1270 = vpack.c.b16 %v871, %v864
    %v1271 = vpack.c.b16 %v872, %v865
    %v1272 = vpack.c.b16 %v873, %v866
    %v1273 = vpack.c.b16 %v881, %v874
    %v1274 = vpack.c.b16 %v882, %v875
    %v1275 = vpack.c.b16 %v883, %v876
    %v1276 = vpack.c.b16 %v884, %v877
    %v1277 = vpack.c.b16 %v885, %v878
    %v1278 = vpack.c.b16 %v886, %v879
    %v1279 = vpack.c.b16 %v887, %v880
    %v1280 = vpack.c.b16 %v895, %v888
    %v1281 = vpack.c.b16 %v896, %v889
    %v1282 = vpack.c.b16 %v897, %v890
    %v1283 = vpack.c.b16 %v898, %v891
    %v1284 = vpack.c.b16 %v899, %v892
    %v1285 = vpack.c.b16 %v900, %v893
    %v1286 = vpack.c.b16 %v901, %v894
    %v1287 = vpack.c.b16 %v909, %v902
    %v1288 = vpack.c.b16 %v910, %v903
    %v1289 = vpack.c.b16 %v911, %v904
    %v1290 = vpack.c.b16 %v912, %v905
    %v1291 = vpack.c.b16 %v913, %v906
    %v1292 = vpack.c.b16 %v914, %v907
    %v1293 = vpack.c.b16 %v915, %v908
    %v1294 = vpack.c.b16 %v923, %v916
    %v1295 = vpack.c.b16 %v924, %v917
    %v1296 = vpack.c.b16 %v925, %v918
    %v1297 = vpack.c.b16 %v926, %v919
    %v1298 = vpack.c.b16 %v927, %v920
    %v1299 = vpack.c.b16 %v928, %v921
    %v1300 = vpack.c.b16 %v929, %v922
    %v1301 = vpack.c.b16 %v937, %v930
    %v1302 = vpack.c.b16 %v938, %v931
    %v1303 = vpack.c.b16 %v939, %v932
    %v1304 = vpack.c.b16 %v940, %v933
    %v1305 = vpack.c.b16 %v941, %v934
    %v1306 = vpack.c.b16 %v942, %v935
    %v1307 = vpack.c.b16 %v943, %v936
    %v1308 = vpack.c.b16 %v951, %v944
    %v1309 = vpack.c.b16 %v952, %v945
    %v1310 = vpack.c.b16 %v953, %v946
    %v1311 = vpack.c.b16 %v954, %v947
    %v1312 = vpack.c.b16 %v955, %v948
    %v1313 = vpack.c.b16 %v956, %v949
    %v1314 = vpack.c.b16 %v957, %v950
    %v1315 = vpack.c.b16 %v965, %v958
    %v1316 = vpack.c.b16 %v966, %v959
    %v1317 = vpack.c.b16 %v967, %v960
    %v1318 = vpack.c.b16 %v968, %v961
    %v1319 = vpack.c.b16 %v969, %v962
    %v1320 = vpack.c.b16 %v970, %v963
    %v1321 = vpack.c.b16 %v971, %v964
    %v1322 = vpack.c.b16 %v979, %v972
    %v1323 = vpack.c.b16 %v980, %v973
    %v1324 = vpack.c.b16 %v981, %v974
    %v1325 = vpack.c.b16 %v982, %v975
    %v1326 = vpack.c.b16 %v983, %v976
    %v1327 = vpack.c.b16 %v984, %v977
    %v1328 = vpack.c.b16 %v985, %v978
    %v1329 = vpack.c.b16 %v993, %v986
    %v1330 = vpack.c.b16 %v994, %v987
    %v1331 = vpack.c.b16 %v995, %v988
    %v1332 = vpack.c.b16 %v996, %v989
    %v1333 = vpack.c.b16 %v997, %v990
    %v1334 = vpack.c.b16 %v998, %v991
    %v1335 = vpack.c.b16 %v999, %v992
    %v1336 = vpack.c.b16 %v1007, %v1000
    %v1337 = vpack.c.b16 %v1008, %v1001
    %v1338 = vpack.c.b16 %v1009, %v1002
    %v1339 = vpack.c.b16 %v1010, %v1003
    %v1340 = vpack.c.b16 %v1011, %v1004
    %v1341 = vpack.c.b16 %v1012, %v1005
    %v1342 = vpack.c.b16 %v1013, %v1006
    %v1343 = vpack.c.b16 %v1021, %v1014
    %v1344 = vpack.c.b16 %v1022, %v1015
    %v1345 = vpack.c.b16 %v1023, %v1016
    %v1346 = vpack.c.b16 %v1024, %v1017
    %v1347 = vpack.c.b16 %v1025, %v1018
    %v1348 = vpack.c.b16 %v1026, %v1019
    %v1349 = vpack.c.b16 %v1027, %v1020
    %v1350 = vpack.c.b16 %v1035, %v1028
    %v1351 = vpack.c.b16 %v1036, %v1029
    %v1352 = vpack.c.b16 %v1037, %v1030
    %v1353 = vpack.c.b16 %v1038, %v1031
    %v1354 = vpack.c.b16 %v1039, %v1032
    %v1355 = vpack.c.b16 %v1040, %v1033
    %v1356 = vpack.c.b16 %v1041, %v1034
    %v1357 = vpack.c.b16 %v1049, %v1042
    %v1358 = vpack.c.b16 %v1050, %v1043
    %v1359 = vpack.c.b16 %v1051, %v1044
    %v1360 = vpack.c.b16 %v1052, %v1045
    %v1361 = vpack.c.b16 %v1053, %v1046
    %v1362 = vpack.c.b16 %v1054, %v1047
    %v1363 = vpack.c.b16 %v1055, %v1048
    %v1364 = vpack.c.b16 %v1063, %v1056
    %v1365 = vpack.c.b16 %v1064, %v1057
    %v1366 = vpack.c.b16 %v1065, %v1058
    %v1367 = vpack.c.b16 %v1066, %v1059
    %v1368 = vpack.c.b16 %v1067, %v1060
    %v1369 = vpack.c.b16 %v1068, %v1061
    %v1370 = vpack.c.b16 %v1069, %v1062
    %v1371 = vpack.c.b16 %v1077, %v1070
    %v1372 = vpack.c.b16 %v1078, %v1071
    %v1373 = vpack.c.b16 %v1079, %v1072
    %v1374 = vpack.c.b16 %v1080, %v1073
    %v1375 = vpack.c.b16 %v1081, %v1074
    %v1376 = vpack.c.b16 %v1082, %v1075
    %v1377 = vpack.c.b16 %v1083, %v1076
    %v1378 = vpack.c.b16 %v1091, %v1084
    %v1379 = vpack.c.b16 %v1092, %v1085
    %v1380 = vpack.c.b16 %v1093, %v1086
    %v1381 = vpack.c.b16 %v1094, %v1087
    %v1382 = vpack.c.b16 %v1095, %v1088
    %v1383 = vpack.c.b16 %v1096, %v1089
    %v1384 = vpack.c.b16 %v1097, %v1090
    %v1385 = vpack.c.b16 %v1105, %v1098
    %v1386 = vpack.c.b16 %v1106, %v1099
    %v1387 = vpack.c.b16 %v1107, %v1100
    %v1388 = vpack.c.b16 %v1108, %v1101
    %v1389 = vpack.c.b16 %v1109, %v1102
    %v1390 = vpack.c.b16 %v1110, %v1103
    %v1391 = vpack.c.b16 %v1111, %v1104
    %v1392 = vpack.c.b16 %v1119, %v1112
    %v1393 = vpack.c.b16 %v1120, %v1113
    %v1394 = vpack.c.b16 %v1121, %v1114
    %v1395 = vpack.c.b16 %v1122, %v1115
    %v1396 = vpack.c.b16 %v1123, %v1116
    %v1397 = vpack.c.b16 %v1124, %v1117
    %v1398 = vpack.c.b16 %v1125, %v1118
    %v1399 = vpack.c.b16 %v1133, %v1126
    %v1400 = vpack.c.b16 %v1134, %v1127
    %v1401 = vpack.c.b16 %v1135, %v1128
    %v1402 = vpack.c.b16 %v1136, %v1129
    %v1403 = vpack.c.b16 %v1137, %v1130
    %v1404 = vpack.c.b16 %v1138, %v1131
    %v1405 = vpack.c.b16 %v1139, %v1132
    %v1406 = vpack.c.b16 %v1147, %v1140
    %v1407 = vpack.c.b16 %v1148, %v1141
    %v1408 = vpack.c.b16 %v1149, %v1142
    %v1409 = vpack.c.b16 %v1150, %v1143
    %v1410 = vpack.c.b16 %v1151, %v1144
    %v1411 = vpack.c.b16 %v1152, %v1145
    %v1412 = vpack.c.b16 %v1153, %v1146
    %v1413 = vpack.c.b16 %v1161, %v1154
    %v1414 = vpack.c.b16 %v1162, %v1155
    %v1415 = vpack.c.b16 %v1163, %v1156
    %v1416 = vpack.c.b16 %v1164, %v1157
    %v1417 = vpack.c.b16 %v1165, %v1158
    %v1418 = vpack.c.b16 %v1166, %v1159
    %v1419 = vpack.c.b16 %v1167, %v1160
    %v1420 = vpack.c.b16 %v1175, %v1168
    %v1421 = vpack.c.b16 %v1176, %v1169
    %v1422 = vpack.c.b16 %v1177, %v1170
    %v1423 = vpack.c.b16 %v1178, %v1171
    %v1424 = vpack.c.b16 %v1179, %v1172
    %v1425 = vpack.c.b16 %v1180, %v1173
    %v1426 = vpack.c.b16 %v1181, %v1174
    %v1427 = vpack.c.b16 %v1189, %v1182
    %v1428 = vpack.c.b16 %v1190, %v1183
    %v1429 = vpack.c.b16 %v1191, %v1184
    %v1430 = vpack.c.b16 %v1192, %v1185
    %v1431 = vpack.c.b16 %v1193, %v1186
    %v1432 = vpack.c.b16 %v1194, %v1187
    %v1433 = vpack.c.b16 %v1195, %v1188
    %v1434 = vpack.c.b16 %v1203, %v1196
    %v1435 = vpack.c.b16 %v1204, %v1197
    %v1436 = vpack.c.b16 %v1205, %v1198
    %v1437 = vpack.c.b16 %v1206, %v1199
    %v1438 = vpack.c.b16 %v1207, %v1200
    %v1439 = vpack.c.b16 %v1208, %v1201
    %v1440 = vpack.c.b16 %v1209, %v1202
    %v1441 = vpack.c.b16 %v1217, %v1210
    %v1442 = vpack.c.b16 %v1218, %v1211
    %v1443 = vpack.c.b16 %v1219, %v1212
    %v1444 = vpack.c.b16 %v1220, %v1213
    %v1445 = vpack.c.b16 %v1221, %v1214
    %v1446 = vpack.c.b16 %v1222, %v1215
    %v1447 = vpack.c.b16 %v1223, %v1216
    %1672 = vmatprep.subr.bf16.mxu0 %v1225
    %1673 = vmatpush1.bf16.msra.mxu0 %v1224
    %1674 = vmatprep.subr.bf16.mxu0 %v1232
    %1675 = vmatpush1.bf16.msra.mxu0 %v1231
    %1676 = vmatprep.subr.bf16.mxu0 %v1239
    %1677 = vmatpush1.bf16.msra.mxu0 %v1238
    %1678 = vmatprep.subr.bf16.mxu0 %v1246
    %1679 = vmatpush1.bf16.msra.mxu0 %v1245
    %1680 = vmatprep.subr.bf16.mxu0 %v1253
    %1681 = vmatpush1.bf16.msra.mxu0 %v1252
    %1682 = vmatprep.subr.bf16.mxu0 %v1260
    %1683 = vmatpush1.bf16.msra.mxu0 %v1259
    %1684 = vmatprep.subr.bf16.mxu0 %v1267
    %1685 = vmatpush1.bf16.msra.mxu0 %v1266
    %1686 = vmatprep.subr.bf16.mxu0 %v1274
    %1687 = vmatpush1.bf16.msra.mxu0 %v1273
    %1688 = vmatprep.subr.bf16.mxu0 %v1281
    %1689 = vmatpush1.bf16.msra.mxu0 %v1280
    %1690 = vmatprep.subr.bf16.mxu0 %v1288
    %1691 = vmatpush1.bf16.msra.mxu0 %v1287
    %1692 = vmatprep.subr.bf16.mxu0 %v1295
    %1693 = vmatpush1.bf16.msra.mxu0 %v1294
    %1694 = vmatprep.subr.bf16.mxu0 %v1302
    %1695 = vmatpush1.bf16.msra.mxu0 %v1301
    %1696 = vmatprep.subr.bf16.mxu0 %v1309
    %1697 = vmatpush1.bf16.msra.mxu0 %v1308
    %1698 = vmatprep.subr.bf16.mxu0 %v1316
    %1699 = vmatpush1.bf16.msra.mxu0 %v1315
    %1700 = vmatprep.subr.bf16.mxu0 %v1323
    %1701 = vmatpush1.bf16.msra.mxu0 %v1322
    %1702 = vmatprep.subr.bf16.mxu0 %v1330
    %1703 = vmatpush1.bf16.msra.mxu0 %v1329
    %1704 = vmatprep.mubr.bf16.mxu0 %v224
    %1705 = vmatmul.mubr.bf16.gmra.mrb[0].mxu0 %v223
    %v1706 = vpop.f32.mrb[0].mxu0
    %v1707 = vadd.f32 %v488, %v1706
    %v1708 = vpop.f32.mrb[0].mxu0
    %v1709 = vadd.f32 %v492, %v1708
    %v1710 = vpop.f32.mrb[0].mxu0
    %v1711 = vpop.f32.mrb[0].mxu0
    %1712 = vdwg.mxu0
    %1713 = vmatprep.subr.bf16.mxu0 %v1337
    %1714 = vmatpush1.bf16.msra.mxu0 %v1336
    %1715 = vmatprep.subr.bf16.mxu0 %v1344
    %1716 = vmatpush1.bf16.msra.mxu0 %v1343
    %1717 = vmatprep.subr.bf16.mxu0 %v1351
    %1718 = vmatpush1.bf16.msra.mxu0 %v1350
    %1719 = vmatprep.subr.bf16.mxu0 %v1358
    %1720 = vmatpush1.bf16.msra.mxu0 %v1357
    %1721 = vmatprep.subr.bf16.mxu0 %v1365
    %1722 = vmatpush1.bf16.msra.mxu0 %v1364
    %1723 = vmatprep.subr.bf16.mxu0 %v1372
    %1724 = vmatpush1.bf16.msra.mxu0 %v1371
    %1725 = vmatprep.subr.bf16.mxu0 %v1379
    %1726 = vmatpush1.bf16.msra.mxu0 %v1378
    %1727 = vmatprep.subr.bf16.mxu0 %v1386
    %1728 = vmatpush1.bf16.msra.mxu0 %v1385
    %1729 = vmatprep.subr.bf16.mxu0 %v1393
    %1730 = vmatpush1.bf16.msra.mxu0 %v1392
    %1731 = vmatprep.subr.bf16.mxu0 %v1400
    %1732 = vmatpush1.bf16.msra.mxu0 %v1399
    %1733 = vmatprep.subr.bf16.mxu0 %v1407
    %1734 = vmatpush1.bf16.msra.mxu0 %v1406
    %1735 = vmatprep.subr.bf16.mxu0 %v1414
    %1736 = vmatpush1.bf16.msra.mxu0 %v1413
    %1737 = vmatprep.subr.bf16.mxu0 %v1421
    %1738 = vmatpush1.bf16.msra.mxu0 %v1420
    %1739 = vmatprep.subr.bf16.mxu0 %v1428
    %1740 = vmatpush1.bf16.msra.mxu0 %v1427
    %1741 = vmatprep.subr.bf16.mxu0 %v1435
    %1742 = vmatpush1.bf16.msra.mxu0 %v1434
    %1743 = vmatprep.subr.bf16.mxu0 %v1442
    %1744 = vmatpush1.bf16.msra.mxu0 %v1441
    %1745 = vmatprep.mubr.bf16.mxu0 %v226
    %1746 = vmatmul.mubr.bf16.gmra.mrb[0].mxu0 %v225
    %v1747 = vpop.f32.mrb[0].mxu0
    %v1748 = vadd.f32 %v1707, %v1747
    %v1749 = vpop.f32.mrb[0].mxu0
    %v1750 = vadd.f32 %v1709, %v1749
    %v1751 = vpop.f32.mrb[0].mxu0
    %v1752 = vpop.f32.mrb[0].mxu0
    %1753 = vdwg.mxu0
    %1754 = vmatprep.subr.bf16.mxu0 %v1227
    %1755 = vmatpush1.bf16.msra.mxu0 %v1226
    %1756 = vmatprep.subr.bf16.mxu0 %v1234
    %1757 = vmatpush1.bf16.msra.mxu0 %v1233
    %1758 = vmatprep.subr.bf16.mxu0 %v1241
    %1759 = vmatpush1.bf16.msra.mxu0 %v1240
    %1760 = vmatprep.subr.bf16.mxu0 %v1248
    %1761 = vmatpush1.bf16.msra.mxu0 %v1247
    %1762 = vmatprep.subr.bf16.mxu0 %v1255
    %1763 = vmatpush1.bf16.msra.mxu0 %v1254
    %1764 = vmatprep.subr.bf16.mxu0 %v1262
    %1765 = vmatpush1.bf16.msra.mxu0 %v1261
    %1766 = vmatprep.subr.bf16.mxu0 %v1269
    %1767 = vmatpush1.bf16.msra.mxu0 %v1268
    %1768 = vmatprep.subr.bf16.mxu0 %v1276
    %1769 = vmatpush1.bf16.msra.mxu0 %v1275
    %1770 = vmatprep.subr.bf16.mxu0 %v1283
    %1771 = vmatpush1.bf16.msra.mxu0 %v1282
    %1772 = vmatprep.subr.bf16.mxu0 %v1290
    %1773 = vmatpush1.bf16.msra.mxu0 %v1289
    %1774 = vmatprep.subr.bf16.mxu0 %v1297
    %1775 = vmatpush1.bf16.msra.mxu0 %v1296
    %1776 = vmatprep.subr.bf16.mxu0 %v1304
    %1777 = vmatpush1.bf16.msra.mxu0 %v1303
    %1778 = vmatprep.subr.bf16.mxu0 %v1311
    %1779 = vmatpush1.bf16.msra.mxu0 %v1310
    %1780 = vmatprep.subr.bf16.mxu0 %v1318
    %1781 = vmatpush1.bf16.msra.mxu0 %v1317
    %1782 = vmatprep.subr.bf16.mxu0 %v1325
    %1783 = vmatpush1.bf16.msra.mxu0 %v1324
    %1784 = vmatprep.subr.bf16.mxu0 %v1332
    %1785 = vmatpush1.bf16.msra.mxu0 %v1331
    %1786 = vmatprep.mubr.bf16.mxu0 %v224
    %1787 = vmatmul.mubr.bf16.gmra.mrb[0].mxu0 %v223
    %v1788 = vpop.f32.mrb[0].mxu0
    %v1789 = vadd.f32 %v496, %v1788
    %v1790 = vpop.f32.mrb[0].mxu0
    %v1791 = vadd.f32 %v500, %v1790
    %v1792 = vpop.f32.mrb[0].mxu0
    %v1793 = vpop.f32.mrb[0].mxu0
    %1794 = vdwg.mxu0
    %1795 = vmatprep.subr.bf16.mxu0 %v1339
    %1796 = vmatpush1.bf16.msra.mxu0 %v1338
    %1797 = vmatprep.subr.bf16.mxu0 %v1346
    %1798 = vmatpush1.bf16.msra.mxu0 %v1345
    %1799 = vmatprep.subr.bf16.mxu0 %v1353
    %1800 = vmatpush1.bf16.msra.mxu0 %v1352
    %1801 = vmatprep.subr.bf16.mxu0 %v1360
    %1802 = vmatpush1.bf16.msra.mxu0 %v1359
    %1803 = vmatprep.subr.bf16.mxu0 %v1367
    %1804 = vmatpush1.bf16.msra.mxu0 %v1366
    %1805 = vmatprep.subr.bf16.mxu0 %v1374
    %1806 = vmatpush1.bf16.msra.mxu0 %v1373
    %1807 = vmatprep.subr.bf16.mxu0 %v1381
    %1808 = vmatpush1.bf16.msra.mxu0 %v1380
    %1809 = vmatprep.subr.bf16.mxu0 %v1388
    %1810 = vmatpush1.bf16.msra.mxu0 %v1387
    %1811 = vmatprep.subr.bf16.mxu0 %v1395
    %1812 = vmatpush1.bf16.msra.mxu0 %v1394
    %1813 = vmatprep.subr.bf16.mxu0 %v1402
    %1814 = vmatpush1.bf16.msra.mxu0 %v1401
    %1815 = vmatprep.subr.bf16.mxu0 %v1409
    %1816 = vmatpush1.bf16.msra.mxu0 %v1408
    %1817 = vmatprep.subr.bf16.mxu0 %v1416
    %1818 = vmatpush1.bf16.msra.mxu0 %v1415
    %1819 = vmatprep.subr.bf16.mxu0 %v1423
    %1820 = vmatpush1.bf16.msra.mxu0 %v1422
    %1821 = vmatprep.subr.bf16.mxu0 %v1430
    %1822 = vmatpush1.bf16.msra.mxu0 %v1429
    %1823 = vmatprep.subr.bf16.mxu0 %v1437
    %1824 = vmatpush1.bf16.msra.mxu0 %v1436
    %1825 = vmatprep.subr.bf16.mxu0 %v1444
    %1826 = vmatpush1.bf16.msra.mxu0 %v1443
    %1827 = vmatprep.mubr.bf16.mxu0 %v226
    %1828 = vmatmul.mubr.bf16.gmra.mrb[0].mxu0 %v225
    %v1829 = vpop.f32.mrb[0].mxu0
    %v1830 = vadd.f32 %v1789, %v1829
    %v1831 = vpop.f32.mrb[0].mxu0
    %v1832 = vadd.f32 %v1791, %v1831
    %v1833 = vpop.f32.mrb[0].mxu0
    %v1834 = vpop.f32.mrb[0].mxu0
    %1835 = vdwg.mxu0
    %1836 = vmatprep.subr.bf16.mxu0 %v1229
    %1837 = vmatpush1.bf16.msra.mxu0 %v1228
    %1838 = vmatprep.subr.bf16.mxu0 %v1236
    %1839 = vmatpush1.bf16.msra.mxu0 %v1235
    %1840 = vmatprep.subr.bf16.mxu0 %v1243
    %1841 = vmatpush1.bf16.msra.mxu0 %v1242
    %1842 = vmatprep.subr.bf16.mxu0 %v1250
    %1843 = vmatpush1.bf16.msra.mxu0 %v1249
    %1844 = vmatprep.subr.bf16.mxu0 %v1257
    %1845 = vmatpush1.bf16.msra.mxu0 %v1256
    %1846 = vmatprep.subr.bf16.mxu0 %v1264
    %1847 = vmatpush1.bf16.msra.mxu0 %v1263
    %1848 = vmatprep.subr.bf16.mxu0 %v1271
    %1849 = vmatpush1.bf16.msra.mxu0 %v1270
    %1850 = vmatprep.subr.bf16.mxu0 %v1278
    %1851 = vmatpush1.bf16.msra.mxu0 %v1277
    %1852 = vmatprep.subr.bf16.mxu0 %v1285
    %1853 = vmatpush1.bf16.msra.mxu0 %v1284
    %1854 = vmatprep.subr.bf16.mxu0 %v1292
    %1855 = vmatpush1.bf16.msra.mxu0 %v1291
    %1856 = vmatprep.subr.bf16.mxu0 %v1299
    %1857 = vmatpush1.bf16.msra.mxu0 %v1298
    %1858 = vmatprep.subr.bf16.mxu0 %v1306
    %1859 = vmatpush1.bf16.msra.mxu0 %v1305
    %1860 = vmatprep.subr.bf16.mxu0 %v1313
    %1861 = vmatpush1.bf16.msra.mxu0 %v1312
    %1862 = vmatprep.subr.bf16.mxu0 %v1320
    %1863 = vmatpush1.bf16.msra.mxu0 %v1319
    %1864 = vmatprep.subr.bf16.mxu0 %v1327
    %1865 = vmatpush1.bf16.msra.mxu0 %v1326
    %1866 = vmatprep.subr.bf16.mxu0 %v1334
    %1867 = vmatpush1.bf16.msra.mxu0 %v1333
    %1868 = vmatprep.mubr.bf16.mxu0 %v224
    %1869 = vmatmul.mubr.bf16.gmra.mrb[0].mxu0 %v223
    %v1870 = vpop.f32.mrb[0].mxu0
    %v1871 = vadd.f32 %v504, %v1870
    %v1872 = vpop.f32.mrb[0].mxu0
    %v1873 = vadd.f32 %v508, %v1872
    %v1874 = vpop.f32.mrb[0].mxu0
    %v1875 = vpop.f32.mrb[0].mxu0
    %1876 = vdwg.mxu0
    %1877 = vmatprep.subr.bf16.mxu0 %v1341
    %1878 = vmatpush1.bf16.msra.mxu0 %v1340
    %1879 = vmatprep.subr.bf16.mxu0 %v1348
    %1880 = vmatpush1.bf16.msra.mxu0 %v1347
    %1881 = vmatprep.subr.bf16.mxu0 %v1355
    %1882 = vmatpush1.bf16.msra.mxu0 %v1354
    %1883 = vmatprep.subr.bf16.mxu0 %v1362
    %1884 = vmatpush1.bf16.msra.mxu0 %v1361
    %1885 = vmatprep.subr.bf16.mxu0 %v1369
    %1886 = vmatpush1.bf16.msra.mxu0 %v1368
    %1887 = vmatprep.subr.bf16.mxu0 %v1376
    %1888 = vmatpush1.bf16.msra.mxu0 %v1375
    %1889 = vmatprep.subr.bf16.mxu0 %v1383
    %1890 = vmatpush1.bf16.msra.mxu0 %v1382
    %1891 = vmatprep.subr.bf16.mxu0 %v1390
    %1892 = vmatpush1.bf16.msra.mxu0 %v1389
    %1893 = vmatprep.subr.bf16.mxu0 %v1397
    %1894 = vmatpush1.bf16.msra.mxu0 %v1396
    %1895 = vmatprep.subr.bf16.mxu0 %v1404
    %1896 = vmatpush1.bf16.msra.mxu0 %v1403
    %1897 = vmatprep.subr.bf16.mxu0 %v1411
    %1898 = vmatpush1.bf16.msra.mxu0 %v1410
    %1899 = vmatprep.subr.bf16.mxu0 %v1418
    %1900 = vmatpush1.bf16.msra.mxu0 %v1417
    %1901 = vmatprep.subr.bf16.mxu0 %v1425
    %1902 = vmatpush1.bf16.msra.mxu0 %v1424
    %1903 = vmatprep.subr.bf16.mxu0 %v1432
    %1904 = vmatpush1.bf16.msra.mxu0 %v1431
    %1905 = vmatprep.subr.bf16.mxu0 %v1439
    %1906 = vmatpush1.bf16.msra.mxu0 %v1438
    %1907 = vmatprep.subr.bf16.mxu0 %v1446
    %1908 = vmatpush1.bf16.msra.mxu0 %v1445
    %1909 = vmatprep.mubr.bf16.mxu0 %v226
    %1910 = vmatmul.mubr.bf16.gmra.mrb[0].mxu0 %v225
    %v1911 = vpop.f32.mrb[0].mxu0
    %v1912 = vadd.f32 %v1871, %v1911
    %v1913 = vpop.f32.mrb[0].mxu0
    %v1914 = vadd.f32 %v1873, %v1913
    %v1915 = vpop.f32.mrb[0].mxu0
    %v1916 = vpop.f32.mrb[0].mxu0
    %1917 = vdwg.mxu0
    %1918 = vmatprep.subr.bf16.mxu0 0
    %1919 = vmatpush1.bf16.msra.mxu0 %v1230
    %1920 = vmatprep.subr.bf16.mxu0 0
    %1921 = vmatpush1.bf16.msra.mxu0 %v1237
    %1922 = vmatprep.subr.bf16.mxu0 0
    %1923 = vmatpush1.bf16.msra.mxu0 %v1244
    %1924 = vmatprep.subr.bf16.mxu0 0
    %1925 = vmatpush1.bf16.msra.mxu0 %v1251
    %1926 = vmatprep.subr.bf16.mxu0 0
    %1927 = vmatpush1.bf16.msra.mxu0 %v1258
    %1928 = vmatprep.subr.bf16.mxu0 0
    %1929 = vmatpush1.bf16.msra.mxu0 %v1265
    %1930 = vmatprep.subr.bf16.mxu0 0
    %1931 = vmatpush1.bf16.msra.mxu0 %v1272
    %1932 = vmatprep.subr.bf16.mxu0 0
    %1933 = vmatpush1.bf16.msra.mxu0 %v1279
    %1934 = vmatprep.subr.bf16.mxu0 0
    %1935 = vmatpush1.bf16.msra.mxu0 %v1286
    %1936 = vmatprep.subr.bf16.mxu0 0
    %1937 = vmatpush1.bf16.msra.mxu0 %v1293
    %1938 = vmatprep.subr.bf16.mxu0 0
    %1939 = vmatpush1.bf16.msra.mxu0 %v1300
    %1940 = vmatprep.subr.bf16.mxu0 0
    %1941 = vmatpush1.bf16.msra.mxu0 %v1307
    %1942 = vmatprep.subr.bf16.mxu0 0
    %1943 = vmatpush1.bf16.msra.mxu0 %v1314
    %1944 = vmatprep.subr.bf16.mxu0 0
    %1945 = vmatpush1.bf16.msra.mxu0 %v1321
    %1946 = vmatprep.subr.bf16.mxu0 0
    %1947 = vmatpush1.bf16.msra.mxu0 %v1328
    %1948 = vmatprep.subr.bf16.mxu0 0
    %1949 = vmatpush1.bf16.msra.mxu0 %v1335
    %1950 = vmatprep.mubr.bf16.mxu0 %v224
    %1951 = vmatmul.mubr.bf16.gmra.mrb[0].mxu0 %v223
    %v1952 = vpop.f32.mrb[0].mxu0
    %v1953 = vadd.f32 %v512, %v1952
    %v1954 = vpop.f32.mrb[0].mxu0
    %v1955 = vpop.f32.mrb[0].mxu0
    %v1956 = vpop.f32.mrb[0].mxu0
    %1957 = vdwg.mxu0
    %1958 = vmatprep.subr.bf16.mxu0 0
    %1959 = vmatpush1.bf16.msra.mxu0 %v1342
    %1960 = vmatprep.subr.bf16.mxu0 0
    %1961 = vmatpush1.bf16.msra.mxu0 %v1349
    %1962 = vmatprep.subr.bf16.mxu0 0
    %1963 = vmatpush1.bf16.msra.mxu0 %v1356
    %1964 = vmatprep.subr.bf16.mxu0 0
    %1965 = vmatpush1.bf16.msra.mxu0 %v1363
    %1966 = vmatprep.subr.bf16.mxu0 0
    %1967 = vmatpush1.bf16.msra.mxu0 %v1370
    %1968 = vmatprep.subr.bf16.mxu0 0
    %1969 = vmatpush1.bf16.msra.mxu0 %v1377
    %1970 = vmatprep.subr.bf16.mxu0 0
    %1971 = vmatpush1.bf16.msra.mxu0 %v1384
    %1972 = vmatprep.subr.bf16.mxu0 0
    %1973 = vmatpush1.bf16.msra.mxu0 %v1391
    %1974 = vmatprep.subr.bf16.mxu0 0
    %1975 = vmatpush1.bf16.msra.mxu0 %v1398
    %1976 = vmatprep.subr.bf16.mxu0 0
    %1977 = vmatpush1.bf16.msra.mxu0 %v1405
    %1978 = vmatprep.subr.bf16.mxu0 0
    %1979 = vmatpush1.bf16.msra.mxu0 %v1412
    %1980 = vmatprep.subr.bf16.mxu0 0
    %1981 = vmatpush1.bf16.msra.mxu0 %v1419
    %1982 = vmatprep.subr.bf16.mxu0 0
    %1983 = vmatpush1.bf16.msra.mxu0 %v1426
    %1984 = vmatprep.subr.bf16.mxu0 0
    %1985 = vmatpush1.bf16.msra.mxu0 %v1433
    %1986 = vmatprep.subr.bf16.mxu0 0
    %1987 = vmatpush1.bf16.msra.mxu0 %v1440
    %1988 = vmatprep.subr.bf16.mxu0 0
    %1989 = vmatpush1.bf16.msra.mxu0 %v1447
    %1990 = vmatprep.mubr.bf16.mxu0 %v226
    %1991 = vmatmul.mubr.bf16.gmra.mrb[0].mxu0 %v225
    %v1992 = vpop.f32.mrb[0].mxu0
    %v1993 = vadd.f32 %v1953, %v1992
    %v1994 = vpop.f32.mrb[0].mxu0
    %v1995 = vpop.f32.mrb[0].mxu0
    %v1996 = vpop.f32.mrb[0].mxu0
    %1997 = vdwg.mxu0
    %v1998 = vsub.f32 0.0, %v1748
    %v1999 = vsub.f32 0.0, %v1750
    %v2000 = vsub.f32 0.0, %v1830
    %v2001 = vsub.f32 0.0, %v1832
    %v2002 = vsub.f32 0.0, %v1912
    %v2003 = vsub.f32 0.0, %v1914
    %v2004 = vsub.f32 0.0, %v1993
    %v2005 = vmul.f32 %v1998, 1.442695
    %v2006 = vpow.pop %v2005
    %v2007 = vmul.f32 %v1999, 1.442695
    %v2008 = vpow.pop %v2007
    %v2009 = vmul.f32 %v2000, 1.442695
    %v2010 = vpow.pop %v2009
    %v2011 = vmul.f32 %v2001, 1.442695
    %v2012 = vpow.pop %v2011
    %v2013 = vmul.f32 %v2002, 1.442695
    %v2014 = vpow.pop %v2013
    %v2015 = vmul.f32 %v2003, 1.442695
    %v2016 = vpow.pop %v2015
    %v2017 = vmul.f32 %v2004, 1.442695
    %v2018 = vpow.pop %v2017
    %v2019 = vadd.f32 %v2006, 1.0
    %v2020 = vadd.f32 %v2008, 1.0
    %v2021 = vadd.f32 %v2010, 1.0
    %v2022 = vadd.f32 %v2012, 1.0
    %v2023 = vadd.f32 %v2014, 1.0
    %v2024 = vadd.f32 %v2016, 1.0
    %v2025 = vadd.f32 %v2018, 1.0
    %v2026 = vrcp.pop %v2019
    %v2027 = vrcp.pop %v2020
    %v2028 = vrcp.pop %v2021
    %v2029 = vrcp.pop %v2022
    %v2030 = vrcp.pop %v2023
    %v2031 = vrcp.pop %v2024
    %v2032 = vrcp.pop %v2025
    %2033 = vst [vmem:[#allocation8] sm:$0xff] %v2026
    %2034 = vst [vmem:[#allocation8 + $0x8] sm:$0xff] %v2027
    %2035 = vst [vmem:[#allocation8 + $0x10] sm:$0xff] %v2028
    %2036 = vst [vmem:[#allocation8 + $0x18] sm:$0xff] %v2029
    %2037 = vst [vmem:[#allocation8 + $0x20] sm:$0xff] %v2030
    %2038 = vst [vmem:[#allocation8 + $0x28] sm:$0xff] %v2031
    %2039 = vst [vmem:[#allocation8 + $0x30] sm:$0xff] %v2032
    // Predicated region
    $region34: #{tpu_custom_call.1} parent=1 // pred_check
      _
    $region35: #{tpu_custom_call.1} parent=1 // pred_check_branch
      %2041 = sbr.rel (0) target = $region37
    $region36: #{tpu_custom_call.1} parent=1 // pred_region
      %s2043 = ssub.s32 896, 896
      %2044 = vsyncadd [#allocation4], %s2043
      %s2046 = sshll.u32 [#allocation8], 4
      %s2047 = int_to_ptr.vmem [resolvable:$true] %s2046
      %2049 = dma.vmem_to_hbm [thread:$0]  %s2047, 896, %s5, [#allocation4]
    $region37: #{tpu_custom_call.1} parent=1 // pred_fallthru
      _
    // Predicated region
    $region38: #{tpu_custom_call.1} parent=1 // pred_check
      _
    $region39: #{tpu_custom_call.1} parent=1 // pred_check_branch
      %2051 = sbr.rel (0) target = $region41
    $region40: #{tpu_custom_call.1} parent=1 // pred_region
      %2052 = dma.done [#allocation4], 896
    $region41: #{tpu_custom_call.1} parent=1 // pred_fallthru
      _
    %2053 = vsyncpa [#allocation3], 1
    %2054 = vsyncpa [#allocation6], 1
    %2055 = vsyncpa [#allocation4], 1

</llo_original>
